<compile_context>
chip_gen: v5e
topology: v5e:2x2
jax: 0.10.0
libtpu: 0.0.40
codegen_flags: <defaults>
</compile_context>

<pallas_src>
import functools
import math

import jax
import jax.numpy as jnp
from jax import lax
from jax.experimental import pallas as pl
from jax.experimental.pallas import tpu as pltpu

NCLASSES = 20
# Feature widths after the backbone heads are replaced with Identity():
#   resnet50.fc.in_features            = 2048
#   densenet121.classifier.in_features = 1024
#   googlenet.fc.in_features           = 1024
N_FEATURES = (2048, 1024, 1024)
SUM_FEATURES = sum(N_FEATURES)   # 4096
OUT_PAD = 128                    # lane-dense padded classifier width (>= NCLASSES)
LANE = 128
SUBLANE = 8


def _round_up(x, m):
    return (x + m - 1) // m * m


def _concate_net_kernel(x_ref, mask_ref, sel_ref, w123_ref, b123_ref, wc_ref,
                        bc_ref, out_ref, acc_ref, *, hw, tile_hw, n_hw_tiles,
                        inv_hw):
    """grid = (batch tiles, H*W tiles); the H*W axis is the reduction axis.

    x_ref   : (TR, tile_hw) f32, TR = tile_n*C (rows are batch-major, channel-minor)
    acc_ref : (TR, 128) f32 lane-partial sums, zeroed at hw step 0
    mask_ref: (TR, C)   f32, mask[r, c] = 1 iff r % C == c
    sel_ref : (tile_n, TR) f32, sel[b, r] = 1 iff r // C == b
    """
    hw_idx = pl.program_id(1)

    @pl.when(hw_idx == 0)
    def _():
        acc_ref[...] = jnp.zeros_like(acc_ref)

    def _accumulate(apply_mask):
        # Per-128-lane-slice RMW adds into the accumulator: no full-block f32
        # temp, so vreg pressure stays at a few registers under the DMA.
        base = (n_hw_tiles - 1) * tile_hw      # global col of this tile iff last
        for i in range(pl.cdiv(tile_hw, LANE)):
            lo = i * LANE
            width = min(LANE, tile_hw - lo)
            if apply_mask and base + lo >= hw:
                break                          # slice fully past the H*W end
            xs = x_ref[:, lo:lo + width].astype(jnp.float32)
            if apply_mask and base + lo + width > hw:
                col = base + lo + lax.broadcasted_iota(jnp.int32, xs.shape, 1)
                xs = jnp.where(col < hw, xs, 0.0)
            acc_ref[:, 0:width] += xs

    if hw % tile_hw == 0:
        _accumulate(apply_mask=False)
    else:
        @pl.when(hw_idx != n_hw_tiles - 1)
        def _():
            _accumulate(apply_mask=False)

        @pl.when(hw_idx == n_hw_tiles - 1)
        def _():
            _accumulate(apply_mask=True)

    @pl.when(hw_idx == n_hw_tiles - 1)
    def _():
        # One cross-lane reduce -> per-row sums; regroup (TR,) -> (tile_n, C)
        # via mask multiply + tiny MXU matmul (no vector reshape/relayout).
        rowsum = jnp.sum(acc_ref[...], axis=-1, keepdims=True)          # (TR, 1)
        per_chan = rowsum * mask_ref[...]                               # (TR, C)
        pooled = jnp.dot(sel_ref[...], per_chan,
                         preferred_element_type=jnp.float32) * inv_hw   # (tile_n, C)

        # TODO(synk): the pretrained resnet50 / densenet121 / googlenet conv
        # towers are not reproducible in-kernel; each frozen featurizer is
        # stood in by global-avg-pool -> linear -> relu emitting the same
        # feature width (2048 / 1024 / 1024), fused into one (C, 4096) matmul.
        feats = jnp.maximum(
            jnp.dot(pooled.astype(jnp.bfloat16), w123_ref[...],
                    preferred_element_type=jnp.float32) + b123_ref[...],
            0.0)                                                        # (tile_n, 4096)

        # concat + Linear(4096, 20), lane-padded to 128 output columns.
        logits = (jnp.dot(feats.astype(jnp.bfloat16), wc_ref[...],
                          preferred_element_type=jnp.float32)
                  + bc_ref[...])                                        # (tile_n, 128)
        out_ref[...] = logits.astype(out_ref.dtype)


def init_params(key, in_channels):
    """Deterministic synthetic parameters (no checkpoint loading)."""
    ks = jax.random.split(key, 8)
    scale = 0.02
    params = {}
    for i, (f, kw, kb) in enumerate(zip(N_FEATURES, ks[0:3], ks[3:6])):
        params[f"w{i + 1}"] = scale * jax.random.normal(kw, (in_channels, f), jnp.float32)
        params[f"b{i + 1}"] = scale * jax.random.normal(kb, (1, f), jnp.float32)
    # Classifier stored as (in_features, nclasses) == nn.Linear weight transposed.
    params["wc"] = scale * jax.random.normal(ks[6], (SUM_FEATURES, NCLASSES), jnp.float32)
    params["bc"] = scale * jax.random.normal(ks[7], (1, NCLASSES), jnp.float32)
    return params


def _pick_tile_n(n, c):
    """Batch rows per block.

    Either covers the whole batch (block dim == full array dim, always
    layout-legal) or is a multiple of 8 so both the (tile_n*C, tile_hw) x block
    and the (tile_n, 128) output block stay 8-sublane aligned.  When the batch
    is large enough, keep >= 2 batch tiles so v7x's two TensorCores both get
    work on the "parallel" axis.
    """
    if n <= SUBLANE:
        return n
    target_rows = 1024                           # ~tile_n*C rows of x per block
    tile_n = max(SUBLANE,
                 min(_round_up(n, SUBLANE),
                     (target_rows // max(c, 1)) // SUBLANE * SUBLANE))
    if tile_n >= n:                              # prefer >= 2 tiles (megacore)
        half = _round_up((n + 1) // 2, SUBLANE)
        tile_n = half if half < n else n
    return tile_n


def _pick_tile_hw(tr_rows, hw, target_block_bytes=8 * 1024 * 1024):
    """~8 MiB f32 x blocks: big enough to hide the ~0.35 us per-step overhead,
    small enough that double buffering + resident weights fit a 48 MiB budget
    (v7x has 64 MiB VMEM per TensorCore)."""
    tile_hw = max(LANE, (target_block_bytes // (tr_rows * 4)) // LANE * LANE)
    return hw if tile_hw >= hw else tile_hw


def concate_net_forward(x_nchw, params):
    n, c, h, w = x_nchw.shape
    hw = h * w
    rows = n * c

    tile_n = _pick_tile_n(n, c)
    tr = tile_n * c
    tile_hw = _pick_tile_hw(tr, hw)
    n_b_tiles = pl.cdiv(n, tile_n)
    n_hw_tiles = pl.cdiv(hw, tile_hw)

    # x: row-major reshape only -- no host-side cast, no host-side pad of x.
    x2d = x_nchw.reshape(rows, hw)

    # Host-side parameter fusion; weights/biases stored bf16 (MXU-native input),
    # classifier lane-padded to 128 output columns.
    w123 = jnp.concatenate([params["w1"], params["w2"], params["w3"]],
                           axis=1).astype(jnp.bfloat16)                   # (C, 4096)
    b123 = jnp.concatenate([params["b1"], params["b2"], params["b3"]],
                           axis=1).astype(jnp.bfloat16)                   # (1, 4096)
    wc = (jnp.zeros((SUM_FEATURES, OUT_PAD), jnp.float32)
          .at[:, :NCLASSES].set(params["wc"]).astype(jnp.bfloat16))       # (4096, 128)
    bc = (jnp.zeros((1, OUT_PAD), jnp.float32)
          .at[:, :NCLASSES].set(params["bc"]).astype(jnp.bfloat16))       # (1, 128)

    # Tiny constants that regroup flat (tile_n*C) row sums into (tile_n, C)
    # inside the kernel without a vector reshape.
    ridx = jnp.arange(tr, dtype=jnp.int32)
    chan_mask = (ridx[:, None] % c
                 == jnp.arange(c, dtype=jnp.int32)[None, :]).astype(jnp.float32)   # (TR, C)
    group_sel = (jnp.arange(tile_n, dtype=jnp.int32)[:, None]
                 == (ridx[None, :] // c)).astype(jnp.float32)                      # (tile_n, TR)

    kernel = functools.partial(_concate_net_kernel, hw=hw, tile_hw=tile_hw,
                               n_hw_tiles=n_hw_tiles, inv_hw=1.0 / float(hw))

    out = pl.pallas_call(
        kernel,
        out_shape=jax.ShapeDtypeStruct((n_b_tiles * tile_n, OUT_PAD), jnp.float32),
        grid_spec=pltpu.PrefetchScalarGridSpec(
            num_scalar_prefetch=0,
            grid=(n_b_tiles, n_hw_tiles),
            in_specs=[
                pl.BlockSpec((tr, tile_hw), lambda b, s: (b, s)),            # x stream
                pl.BlockSpec((tr, c), lambda b, s: (0, 0)),                  # chan_mask
                pl.BlockSpec((tile_n, tr), lambda b, s: (0, 0)),             # group_sel
                pl.BlockSpec((c, SUM_FEATURES), lambda b, s: (0, 0)),        # w123
                pl.BlockSpec((1, SUM_FEATURES), lambda b, s: (0, 0)),        # b123
                pl.BlockSpec((SUM_FEATURES, OUT_PAD), lambda b, s: (0, 0)),  # wc
                pl.BlockSpec((1, OUT_PAD), lambda b, s: (0, 0)),             # bc
            ],
            out_specs=pl.BlockSpec((tile_n, OUT_PAD), lambda b, s: (b, 0)),
            scratch_shapes=[pltpu.VMEM((tr, LANE), jnp.float32)],
        ),
        compiler_params=pltpu.CompilerParams(
            dimension_semantics=("parallel", "arbitrary"),
            vmem_limit_bytes=48 * 1024 * 1024,
        ),
    )(x2d, chan_mask, group_sel, w123, b123, wc, bc)

    return out[:n, :NCLASSES]


def _reference_forward(x_nchw, params):
    """Pure-JAX f32 reference (no bf16 shortcuts)."""
    pooled = jnp.mean(x_nchw.astype(jnp.float32), axis=(2, 3))
    feats = []
    for i in range(3):
        feats.append(jnp.maximum(pooled @ params[f"w{i + 1}"] + params[f"b{i + 1}"], 0.0))
    return jnp.concatenate(feats, axis=1) @ params["wc"] + params["bc"]


if __name__ == "__main__":
    key = jax.random.PRNGKey(0)
    k_x, k_p = jax.random.split(key)

    N, C, H, W = 2, 4, 16, 16
    x = jax.random.normal(k_x, (N, C, H, W), jnp.float32)   # NCHW, like PyTorch
    params = init_params(k_p, in_channels=C)

    out = jax.block_until_ready(concate_net_forward(x, params))
    ref = _reference_forward(x, params)

    assert out.shape == (N, NCLASSES), out.shape
    max_err = float(jnp.max(jnp.abs(out - ref)))
    assert jnp.allclose(out, ref, atol=2e-3, rtol=2e-2), max_err

    print("KERNEL_OK")
</pallas_src>

<mosaic_0001>
module attributes {stable_mosaic.version = 11 : i64} {
  func.func @_concate_net_kernel(%arg0: i32, %arg1: i32, %arg2: memref<8x256xf32, #tpu.memory_space<vmem>>, %arg3: memref<8x4xf32, #tpu.memory_space<vmem>>, %arg4: memref<2x8xf32, #tpu.memory_space<vmem>>, %arg5: memref<4x4096xbf16, #tpu.memory_space<vmem>>, %arg6: memref<1x4096xbf16, #tpu.memory_space<vmem>>, %arg7: memref<4096x128xbf16, #tpu.memory_space<vmem>>, %arg8: memref<1x128xbf16, #tpu.memory_space<vmem>>, %arg9: memref<2x128xf32, #tpu.memory_space<vmem>>, %arg10: memref<8x128xf32, #tpu.memory_space<vmem>>) attributes {dimension_semantics = [#tpu.dimension_semantics<parallel>, #tpu.dimension_semantics<arbitrary>], iteration_bounds = array<i64: 1, 1>, scalar_prefetch = 0 : i64, scratch_operands = 1 : i64, tpu.core_type = #tpu.core_type<tc>, window_params = [{transform_indices = @transform_0, window_bounds = array<i64: 8, 256>}, {pipeline_mode = #tpu.pipeline_mode<synchronous>, transform_indices = @transform_1, window_bounds = array<i64: 8, 4>}, {pipeline_mode = #tpu.pipeline_mode<synchronous>, transform_indices = @transform_2, window_bounds = array<i64: 2, 8>}, {pipeline_mode = #tpu.pipeline_mode<synchronous>, transform_indices = @transform_3, window_bounds = array<i64: 4, 4096>}, {pipeline_mode = #tpu.pipeline_mode<synchronous>, transform_indices = @transform_4, window_bounds = array<i64: 1, 4096>}, {pipeline_mode = #tpu.pipeline_mode<synchronous>, transform_indices = @transform_5, window_bounds = array<i64: 4096, 128>}, {pipeline_mode = #tpu.pipeline_mode<synchronous>, transform_indices = @transform_6, window_bounds = array<i64: 1, 128>}, {transform_indices = @transform_7, window_bounds = array<i64: 2, 128>}]} {
    %c0_i32 = arith.constant 0 : i32
    %0 = arith.cmpi eq, %arg1, %c0_i32 : i32
    %1 = arith.extui %0 : i1 to i32
    %c0_i32_0 = arith.constant 0 : i32
    %2 = arith.cmpi ne, %1, %c0_i32_0 : i32
    scf.if %2 {
      %cst = arith.constant 0.000000e+00 : f32
      %14 = vector.broadcast %cst : f32 to vector<8x128xf32>
      %c0_13 = arith.constant 0 : index
      %c0_14 = arith.constant 0 : index
      %15 = vector.load %arg10[%c0_13, %c0_14] : memref<8x128xf32, #tpu.memory_space<vmem>>, vector<8x128xf32>
      tpu.vector_store %arg10[%c0_13, %c0_14], %14 {strides = array<i32>} : memref<8x128xf32, #tpu.memory_space<vmem>>, vector<8x128xf32>,
    } else {
    }
    %c0 = arith.constant 0 : index
    %c0_1 = arith.constant 0 : index
    %3 = vector.load %arg2[%c0, %c0_1] : memref<8x256xf32, #tpu.memory_space<vmem>>, vector<8x128xf32>
    %c0_2 = arith.constant 0 : index
    %c0_3 = arith.constant 0 : index
    %4 = vector.load %arg10[%c0_2, %c0_3] : memref<8x128xf32, #tpu.memory_space<vmem>>, vector<8x128xf32>
    %5 = arith.addf %4, %3 : vector<8x128xf32>
    %c0_4 = arith.constant 0 : index
    %c0_5 = arith.constant 0 : index
    %6 = vector.load %arg10[%c0_4, %c0_5] : memref<8x128xf32, #tpu.memory_space<vmem>>, vector<8x128xf32>
    tpu.vector_store %arg10[%c0_4, %c0_5], %5 {strides = array<i32>} : memref<8x128xf32, #tpu.memory_space<vmem>>, vector<8x128xf32>,
    %c0_6 = arith.constant 0 : index
    %c128 = arith.constant 128 : index
    %7 = vector.load %arg2[%c0_6, %c128] : memref<8x256xf32, #tpu.memory_space<vmem>>, vector<8x128xf32>
    %c0_7 = arith.constant 0 : index
    %c0_8 = arith.constant 0 : index
    %8 = vector.load %arg10[%c0_7, %c0_8] : memref<8x128xf32, #tpu.memory_space<vmem>>, vector<8x128xf32>
    %9 = arith.addf %8, %7 : vector<8x128xf32>
    %c0_9 = arith.constant 0 : index
    %c0_10 = arith.constant 0 : index
    %10 = vector.load %arg10[%c0_9, %c0_10] : memref<8x128xf32, #tpu.memory_space<vmem>>, vector<8x128xf32>
    tpu.vector_store %arg10[%c0_9, %c0_10], %9 {strides = array<i32>} : memref<8x128xf32, #tpu.memory_space<vmem>>, vector<8x128xf32>,
    %c0_i32_11 = arith.constant 0 : i32
    %11 = arith.cmpi eq, %arg1, %c0_i32_11 : i32
    %12 = arith.extui %11 : i1 to i32
    %c0_i32_12 = arith.constant 0 : i32
    %13 = arith.cmpi ne, %12, %c0_i32_12 : i32
    scf.if %13 {
      %c0_13 = arith.constant 0 : index
      %c0_14 = arith.constant 0 : index
      %14 = vector.load %arg10[%c0_13, %c0_14] : memref<8x128xf32, #tpu.memory_space<vmem>>, vector<8x128xf32>
      %cst = arith.constant dense<0.000000e+00> : vector<8xf32>
      %15 = vector.multi_reduction <add>, %14, %cst [1] : vector<8x128xf32> to vector<8xf32>
      %16 = vector.shape_cast %15 : vector<8xf32> to vector<8x1xf32>
      %c0_15 = arith.constant 0 : index
      %c0_16 = arith.constant 0 : index
      %17 = vector.load %arg3[%c0_15, %c0_16] : memref<8x4xf32, #tpu.memory_space<vmem>>, vector<8x4xf32>
      %18 = vector.broadcast %16 : vector<8x1xf32> to vector<8x4xf32>
      %19 = arith.mulf %18, %17 : vector<8x4xf32>
      %c0_17 = arith.constant 0 : index
      %c0_18 = arith.constant 0 : index
      %20 = vector.load %arg4[%c0_17, %c0_18] : memref<2x8xf32, #tpu.memory_space<vmem>>, vector<2x8xf32>
      %cst_19 = arith.constant dense<0.000000e+00> : vector<2x4xf32>
      %21 = tpu.matmul %20, %19, %cst_19 {dimension_numbers = #tpu.dot_dimension_numbers<[1], [0], [0], [1], [0, 0, 1, 1], [], []>} : vector<2x8xf32>, vector<8x4xf32>, vector<2x4xf32> -> vector<2x4xf32>
      %cst_20 = arith.constant 3.906250e-03 : f32
      %22 = vector.broadcast %cst_20 : f32 to vector<2x4xf32>
      %23 = arith.mulf %21, %22 : vector<2x4xf32>
      %24 = arith.truncf %23 : vector<2x4xf32> to vector<2x4xbf16>
      %c0_21 = arith.constant 0 : index
      %c0_22 = arith.constant 0 : index
      %25 = vector.load %arg5[%c0_21, %c0_22] : memref<4x4096xbf16, #tpu.memory_space<vmem>>, vector<4x4096xbf16>
      %cst_23 = arith.constant dense<0.000000e+00> : vector<2x4096xf32>
      %26 = tpu.matmul %24, %25, %cst_23 {dimension_numbers = #tpu.dot_dimension_numbers<[1], [0], [0], [1], [0, 0, 1, 1], [], []>} : vector<2x4xbf16>, vector<4x4096xbf16>, vector<2x4096xf32> -> vector<2x4096xf32>
      %c0_24 = arith.constant 0 : index
      %c0_25 = arith.constant 0 : index
      %27 = vector.load %arg6[%c0_24, %c0_25] : memref<1x4096xbf16, #tpu.memory_space<vmem>>, vector<1x4096xbf16>
      %28 = arith.extf %27 : vector<1x4096xbf16> to vector<1x4096xf32>
      %29 = vector.broadcast %28 : vector<1x4096xf32> to vector<2x4096xf32>
      %30 = arith.addf %26, %29 : vector<2x4096xf32>
      %cst_26 = arith.constant 0.000000e+00 : f32
      %31 = vector.broadcast %cst_26 : f32 to vector<2x4096xf32>
      %32 = arith.maximumf %30, %31 : vector<2x4096xf32>
      %33 = arith.truncf %32 : vector<2x4096xf32> to vector<2x4096xbf16>
      %c0_27 = arith.constant 0 : index
      %c0_28 = arith.constant 0 : index
      %34 = vector.load %arg7[%c0_27, %c0_28] : memref<4096x128xbf16, #tpu.memory_space<vmem>>, vector<4096x128xbf16>
      %cst_29 = arith.constant dense<0.000000e+00> : vector<2x128xf32>
      %35 = tpu.matmul %33, %34, %cst_29 {dimension_numbers = #tpu.dot_dimension_numbers<[1], [0], [0], [1], [0, 0, 1, 1], [], []>} : vector<2x4096xbf16>, vector<4096x128xbf16>, vector<2x128xf32> -> vector<2x128xf32>
      %c0_30 = arith.constant 0 : index
      %c0_31 = arith.constant 0 : index
      %36 = vector.load %arg8[%c0_30, %c0_31] : memref<1x128xbf16, #tpu.memory_space<vmem>>, vector<1x128xbf16>
      %37 = arith.extf %36 : vector<1x128xbf16> to vector<1x128xf32>
      %38 = vector.broadcast %37 : vector<1x128xf32> to vector<2x128xf32>
      %39 = arith.addf %35, %38 : vector<2x128xf32>
      %c0_32 = arith.constant 0 : index
      %c0_33 = arith.constant 0 : index
      %40 = vector.load %arg9[%c0_32, %c0_33] : memref<2x128xf32, #tpu.memory_space<vmem>>, vector<2x128xf32>
      tpu.vector_store %arg9[%c0_32, %c0_33], %39 {strides = array<i32>} : memref<2x128xf32, #tpu.memory_space<vmem>>, vector<2x128xf32>,
    } else {
    }
    return
  }
  func.func @transform_0(%arg0: i32, %arg1: i32) -> (i32, i32) {
    %c0_i32 = arith.constant 0 : i32
    return %arg0, %arg1 : i32, i32
  }
  func.func @transform_1(%arg0: i32, %arg1: i32) -> (i32, i32) {
    %c0_i32 = arith.constant 0 : i32
    %c0_i32_0 = arith.constant 0 : i32
    %c0_i32_1 = arith.constant 0 : i32
    return %c0_i32, %c0_i32_0 : i32, i32
  }
  func.func @transform_2(%arg0: i32, %arg1: i32) -> (i32, i32) {
    %c0_i32 = arith.constant 0 : i32
    %c0_i32_0 = arith.constant 0 : i32
    %c0_i32_1 = arith.constant 0 : i32
    return %c0_i32, %c0_i32_0 : i32, i32
  }
  func.func @transform_3(%arg0: i32, %arg1: i32) -> (i32, i32) {
    %c0_i32 = arith.constant 0 : i32
    %c0_i32_0 = arith.constant 0 : i32
    %c0_i32_1 = arith.constant 0 : i32
    return %c0_i32, %c0_i32_0 : i32, i32
  }
  func.func @transform_4(%arg0: i32, %arg1: i32) -> (i32, i32) {
    %c0_i32 = arith.constant 0 : i32
    %c0_i32_0 = arith.constant 0 : i32
    %c0_i32_1 = arith.constant 0 : i32
    return %c0_i32, %c0_i32_0 : i32, i32
  }
  func.func @transform_5(%arg0: i32, %arg1: i32) -> (i32, i32) {
    %c0_i32 = arith.constant 0 : i32
    %c0_i32_0 = arith.constant 0 : i32
    %c0_i32_1 = arith.constant 0 : i32
    return %c0_i32, %c0_i32_0 : i32, i32
  }
  func.func @transform_6(%arg0: i32, %arg1: i32) -> (i32, i32) {
    %c0_i32 = arith.constant 0 : i32
    %c0_i32_0 = arith.constant 0 : i32
    %c0_i32_1 = arith.constant 0 : i32
    return %c0_i32, %c0_i32_0 : i32, i32
  }
  func.func @transform_7(%arg0: i32, %arg1: i32) -> (i32, i32) {
    %c0_i32 = arith.constant 0 : i32
    %c0_i32_0 = arith.constant 0 : i32
    return %arg0, %c0_i32 : i32, i32
  }
}

</mosaic_0001>

<llo_original>
// kernel: tpu_custom_call.1
$region0: #{tpu_custom_call.1}
  #allocation0 [shape = 'u32[]', space=smem, size = 0x4, offset = 0x4, fixed_abs, tag = 'smem constant byte address 0x4 - core index']
  #allocation1 [shape = 'u32[72,128]{1,0:T(1,128)}', space=vmem, size = 0x9000, scoped, tag = 'internal scratch']
  #allocation2 [shape = 'f32[8,128]{1,0:T(8,128)}', space=vmem, size = 0x1000, scoped, tag = 'scratch operand']
  %s0 = inlined_call_operand.hbm [shape: f32[8,256], index: 0, kind: input, shape index: {}]
  %s1 = inlined_call_operand.vmem [shape: f32[8,4], index: 1, kind: input, shape index: {}]
  %s2 = inlined_call_operand.vmem [shape: f32[2,8], index: 2, kind: input, shape index: {}]
  %s3 = inlined_call_operand.hbm [shape: bf16[4,4096], index: 3, kind: input, shape index: {}]
  %s4 = inlined_call_operand.hbm [shape: bf16[1,4096], index: 4, kind: input, shape index: {}]
  %s5 = inlined_call_operand.hbm [shape: bf16[4096,128], index: 5, kind: input, shape index: {}]
  %s6 = inlined_call_operand.vmem [shape: bf16[1,128], index: 6, kind: input, shape index: {}]
  %s7 = inlined_call_operand.hbm [shape: f32[2,128], index: 7, kind: output, shape index: {}]
  %s8 = sld [smem:[#allocation0]]
  $region62: #{tpu_custom_call.1} parent=0
    _
  %s10 = ssub.s32 1, %s8
  %s11 = scalar_select 0, %s10, %s8
  $region1: #{tpu_custom_call.1} parent=0
    #allocation3 [shape = 'u8[8192]{0}', space=vmem, size = 0x2000, scoped, tag = 'input window, operand 0, single buffered']
    #allocation4 [shape = 's32[1]{0}', space=sflag, size = 0x4, scoped, tag = 'scoped memory for tpu_custom_call.1']
    #allocation5 [shape = 's32[1]{0}', space=sflag, size = 0x4, scoped, tag = 'scoped memory for tpu_custom_call.1']
    #allocation6 [shape = 'u8[32768]{0}', space=vmem, size = 0x8000, scoped, tag = 'input window, operand 3, single buffered']
    #allocation7 [shape = 's32[1]{0}', space=sflag, size = 0x4, scoped, tag = 'scoped memory for tpu_custom_call.1']
    #allocation8 [shape = 'u8[16384]{0}', space=vmem, size = 0x4000, scoped, tag = 'input window, operand 4, single buffered']
    #allocation9 [shape = 'u8[1048576]{0}', space=vmem, size = 0x100000, scoped, tag = 'input window, operand 5, single buffered']
    #allocation10 [shape = 's32[1]{0}', space=sflag, size = 0x4, scoped, tag = 'scoped memory for tpu_custom_call.1']
    #allocation11 [shape = 'u8[1024]{0}', space=vmem, size = 0x400, scoped, tag = 'output window, operand 0, single buffered']
    %12 = vsyncpa [#allocation4], 0
    %13 = vsyncpa [#allocation7], 0
    %14 = vsyncpa [#allocation10], 0
    %15 = vsyncpa [#allocation5], 0
    // Predicated region
    $region2: #{tpu_custom_call.1} parent=1 // pred_check
      _
    $region3: #{tpu_custom_call.1} parent=1 // pred_check_branch
      %17 = sbr.rel (0) target = $region5
    $region4: #{tpu_custom_call.1} parent=1 // pred_region
      %19 = vsyncadd [#allocation4], 0
      %s21 = sshll.u32 %s0, 4
      %s22 = int_to_ptr.hbm [resolvable:$true] %s21
      %s23 = sshll.u32 [#allocation3], 4
      %s24 = int_to_ptr.vmem [resolvable:$true] %s23
      %26 = dma.hbm_to_vmem [thread:$0]  %s22, 256, %s24, [#allocation4]
    $region5: #{tpu_custom_call.1} parent=1 // pred_fallthru
      _
    // Predicated region
    $region6: #{tpu_custom_call.1} parent=1 // pred_check
      _
    $region7: #{tpu_custom_call.1} parent=1 // pred_check_branch
      %28 = sbr.rel (0) target = $region9
    $region8: #{tpu_custom_call.1} parent=1 // pred_region
      _
    $region9: #{tpu_custom_call.1} parent=1 // pred_fallthru
      _
    // Predicated region
    $region10: #{tpu_custom_call.1} parent=1 // pred_check
      _
    $region11: #{tpu_custom_call.1} parent=1 // pred_check_branch
      %30 = sbr.rel (0) target = $region13
    $region12: #{tpu_custom_call.1} parent=1 // pred_region
      _
    $region13: #{tpu_custom_call.1} parent=1 // pred_fallthru
      _
    // Predicated region
    $region14: #{tpu_custom_call.1} parent=1 // pred_check
      _
    $region15: #{tpu_custom_call.1} parent=1 // pred_check_branch
      %32 = sbr.rel (0) target = $region17
    $region16: #{tpu_custom_call.1} parent=1 // pred_region
      %34 = vsyncadd [#allocation7], 0
      %s36 = sshll.u32 %s3, 4
      %s37 = int_to_ptr.hbm [resolvable:$true] %s36
      %s38 = sshll.u32 [#allocation6], 4
      %s39 = int_to_ptr.vmem [resolvable:$true] %s38
      %41 = dma.hbm_to_vmem [thread:$0]  %s37, 1024, %s39, [#allocation7]
    $region17: #{tpu_custom_call.1} parent=1 // pred_fallthru
      _
    // Predicated region
    $region18: #{tpu_custom_call.1} parent=1 // pred_check
      _
    $region19: #{tpu_custom_call.1} parent=1 // pred_check_branch
      %43 = sbr.rel (0) target = $region21
    $region20: #{tpu_custom_call.1} parent=1 // pred_region
      %45 = vsyncadd [#allocation7], 0
      %s47 = sshll.u32 %s4, 4
      %s48 = int_to_ptr.hbm [resolvable:$true] %s47
      %s49 = sshll.u32 [#allocation8], 4
      %s50 = int_to_ptr.vmem [resolvable:$true] %s49
      %52 = dma.hbm_to_vmem [thread:$0]  %s48, 512, %s50, [#allocation7]
    $region21: #{tpu_custom_call.1} parent=1 // pred_fallthru
      _
    // Predicated region
    $region22: #{tpu_custom_call.1} parent=1 // pred_check
      _
    $region23: #{tpu_custom_call.1} parent=1 // pred_check_branch
      %54 = sbr.rel (0) target = $region25
    $region24: #{tpu_custom_call.1} parent=1 // pred_region
      %56 = vsyncadd [#allocation10], 0
      %s57 = sshll.u32 %s5, 4
      %s58 = int_to_ptr.hbm [resolvable:$true] %s57
      %s59 = sshll.u32 [#allocation9], 4
      %s60 = int_to_ptr.vmem [resolvable:$true] %s59
      %65 = dma.hbm_to_vmem [thread:$0]  %s58, 32768, %s60, [#allocation10], 64, 64, 4
    $region25: #{tpu_custom_call.1} parent=1 // pred_fallthru
      _
    // Predicated region
    $region26: #{tpu_custom_call.1} parent=1 // pred_check
      _
    $region27: #{tpu_custom_call.1} parent=1 // pred_check_branch
      %67 = sbr.rel (0) target = $region29
    $region28: #{tpu_custom_call.1} parent=1 // pred_region
      _
    $region29: #{tpu_custom_call.1} parent=1 // pred_fallthru
      _
    // Predicated region
    $region30: #{tpu_custom_call.1} parent=1 // pred_check
      _
    $region31: #{tpu_custom_call.1} parent=1 // pred_check_branch
      %69 = sbr.rel (0) target = $region33
    $region32: #{tpu_custom_call.1} parent=1 // pred_region
      %71 = dma.done [#allocation4], 256
    $region33: #{tpu_custom_call.1} parent=1 // pred_fallthru
      _
    // Predicated region
    $region34: #{tpu_custom_call.1} parent=1 // pred_check
      _
    $region35: #{tpu_custom_call.1} parent=1 // pred_check_branch
      %73 = sbr.rel (0) target = $region37
    $region36: #{tpu_custom_call.1} parent=1 // pred_region
      %75 = dma.done [#allocation7], 1024
    $region37: #{tpu_custom_call.1} parent=1 // pred_fallthru
      _
    // Predicated region
    $region38: #{tpu_custom_call.1} parent=1 // pred_check
      _
    $region39: #{tpu_custom_call.1} parent=1 // pred_check_branch
      %77 = sbr.rel (0) target = $region41
    $region40: #{tpu_custom_call.1} parent=1 // pred_region
      %79 = dma.done [#allocation7], 512
    $region41: #{tpu_custom_call.1} parent=1 // pred_fallthru
      _
    // Predicated region
    $region42: #{tpu_custom_call.1} parent=1 // pred_check
      _
    $region43: #{tpu_custom_call.1} parent=1 // pred_check_branch
      %81 = sbr.rel (0) target = $region45
    $region44: #{tpu_custom_call.1} parent=1 // pred_region
      %83 = dma.done [#allocation10], 32768
    $region45: #{tpu_custom_call.1} parent=1 // pred_fallthru
      _
    %p85 = scmp.eq.s32.totalorder 0, 0
    // Predicated region
    $region46: #{tpu_custom_call.1} parent=1 // pred_check
      %p86 = pneg %p85
    $region47: #{tpu_custom_call.1} parent=1 // pred_check_branch
      %88 = sbr.rel (%p86) target = $region49
    $region48: #{tpu_custom_call.1} parent=1 // pred_region
      %89 = vst [vmem:[#allocation2] sm:$0xff] 0.0
    $region49: #{tpu_custom_call.1} parent=1 // pred_fallthru
      _
    %v90 = vld [vmem:[#allocation3] sm:$0xff]
    %v91 = vld [vmem:[#allocation2] sm:$0xff]
    %v92 = vadd.f32 %v91, %v90
    %93 = vst [vmem:[#allocation2] sm:$0xff] %v92
    %v94 = vld [vmem:[#allocation3 + $0x8] sm:$0xff]
    %v95 = vld [vmem:[#allocation2] sm:$0xff]
    %v96 = vadd.f32 %v95, %v94
    %97 = vst [vmem:[#allocation2] sm:$0xff] %v96
    // Predicated region
    $region50: #{tpu_custom_call.1} parent=1 // pred_check
      %p98 = pneg %p85
    $region51: #{tpu_custom_call.1} parent=1 // pred_check_branch
      %100 = sbr.rel (%p98) target = $region53
    $region52: #{tpu_custom_call.1} parent=1 // pred_region
      %v101 = vld [vmem:[#allocation2] sm:$0xff]
      %102 = vadd.xlane.f32.xlu0 %v101
      %v103 = vpop.xlane.xlu0 %102
      %v104 = vld [vmem:[%s1] sm:$0xff]
      %v105 = vmul.f32 %v103, %v104
      %v106 = vld [vmem:[%s2] sm:$0x3]
      %vm107 = vcmask 64512
      %v109 = vsel %vm107, %v106, 0
      %111 = vmatpush.msra.mxu0 0.0
      %112 = vmatpush.msra.mxu0 0.0
      %113 = vmatpush.msra.mxu0 0.0
      %114 = vmatpush.msra.mxu0 0.0
      %115 = vmatpush.msra.mxu0 0.0
      %116 = vmatpush.msra.mxu0 0.0
      %117 = vmatpush.msra.mxu0 0.0
      %118 = vmatpush.msra.mxu0 0.0
      %119 = vmatpush.msra.mxu0 0.0
      %120 = vmatpush.msra.mxu0 0.0
      %121 = vmatpush.msra.mxu0 0.0
      %122 = vmatpush.msra.mxu0 0.0
      %123 = vmatpush.msra.mxu0 0.0
      %124 = vmatpush.msra.mxu0 0.0
      %125 = vmatpush.msra.mxu0 0.0
      %126 = vmatpush.msra.mxu0 %v105
      %127 = vmatmul.f32.gmra.mxu0 %v109
      %v128 = vpop.f32.mrf.mxu0
      %v129 = vadd.f32 0.0, %v128
      %130 = vdwg.mxu0
      %v131 = vmul.f32 %v129, 0.00390625
      %v132 = vpack.c.bf16 %v131, %v131
      %v133 = vld [vmem:[#allocation6] sm:$0xff]
      %v134 = vld [vmem:[#allocation6 + $0x8] sm:$0xff]
      %v135 = vld [vmem:[#allocation6 + $0x10] sm:$0xff]
      %v136 = vld [vmem:[#allocation6 + $0x18] sm:$0xff]
      %v137 = vld [vmem:[#allocation6 + $0x20] sm:$0xff]
      %v138 = vld [vmem:[#allocation6 + $0x28] sm:$0xff]
      %v139 = vld [vmem:[#allocation6 + $0x30] sm:$0xff]
      %v140 = vld [vmem:[#allocation6 + $0x38] sm:$0xff]
      %v141 = vld [vmem:[#allocation8] sm:$0xff]
      %v142 = vld [vmem:[#allocation8 + $0x8] sm:$0xff]
      %v143 = vld [vmem:[#allocation8 + $0x10] sm:$0xff]
      %v144 = vld [vmem:[#allocation8 + $0x18] sm:$0xff]
      %v145 = vunpack.c.l.bf16 %v141
      %v146 = vunpack.c.h.bf16 %v141
      %v147 = vunpack.c.l.bf16 %v142
      %v148 = vunpack.c.h.bf16 %v142
      %v149 = vunpack.c.l.bf16 %v143
      %v150 = vunpack.c.h.bf16 %v143
      %v151 = vunpack.c.l.bf16 %v144
      %v152 = vunpack.c.h.bf16 %v144
      %v161 = vperm.slane %v145, 0
      %v162 = vperm.slane %v145, 2
      %v163 = vperm.slane %v145, 4
      %v164 = vperm.slane %v145, 6
      %v165 = vperm.slane %v146, 0
      %v166 = vperm.slane %v146, 2
      %v167 = vperm.slane %v146, 4
      %v168 = vperm.slane %v146, 6
      %v169 = vperm.slane %v147, 0
      %v170 = vperm.slane %v147, 2
      %v171 = vperm.slane %v147, 4
      %v172 = vperm.slane %v147, 6
      %v173 = vperm.slane %v148, 0
      %v174 = vperm.slane %v148, 2
      %v175 = vperm.slane %v148, 4
      %v176 = vperm.slane %v148, 6
      %v177 = vperm.slane %v149, 0
      %v178 = vperm.slane %v149, 2
      %v179 = vperm.slane %v149, 4
      %v180 = vperm.slane %v149, 6
      %v181 = vperm.slane %v150, 0
      %v182 = vperm.slane %v150, 2
      %v183 = vperm.slane %v150, 4
      %v184 = vperm.slane %v150, 6
      %v185 = vperm.slane %v151, 0
      %v186 = vperm.slane %v151, 2
      %v187 = vperm.slane %v151, 4
      %v188 = vperm.slane %v151, 6
      %v189 = vperm.slane %v152, 0
      %v190 = vperm.slane %v152, 2
      %v191 = vperm.slane %v152, 4
      %v192 = vperm.slane %v152, 6
      %v225 = vperm.slane %v161, 0
      %v226 = vperm.slane %v162, 0
      %v227 = vperm.slane %v163, 0
      %v228 = vperm.slane %v164, 0
      %v229 = vperm.slane %v165, 0
      %v230 = vperm.slane %v166, 0
      %v231 = vperm.slane %v167, 0
      %v232 = vperm.slane %v168, 0
      %v233 = vperm.slane %v169, 0
      %v234 = vperm.slane %v170, 0
      %v235 = vperm.slane %v171, 0
      %v236 = vperm.slane %v172, 0
      %v237 = vperm.slane %v173, 0
      %v238 = vperm.slane %v174, 0
      %v239 = vperm.slane %v175, 0
      %v240 = vperm.slane %v176, 0
      %v241 = vperm.slane %v177, 0
      %v242 = vperm.slane %v178, 0
      %v243 = vperm.slane %v179, 0
      %v244 = vperm.slane %v180, 0
      %v245 = vperm.slane %v181, 0
      %v246 = vperm.slane %v182, 0
      %v247 = vperm.slane %v183, 0
      %v248 = vperm.slane %v184, 0
      %v249 = vperm.slane %v185, 0
      %v250 = vperm.slane %v186, 0
      %v251 = vperm.slane %v187, 0
      %v252 = vperm.slane %v188, 0
      %v253 = vperm.slane %v189, 0
      %v254 = vperm.slane %v190, 0
      %v255 = vperm.slane %v191, 0
      %v256 = vperm.slane %v192, 0
      %258 = vst [vmem:[#allocation1] ss:$4 sm:$0xff] %v133
      %s260 = scalar_lea.vmem [#allocation1], 32
      %261 = vst [vmem:[%s260] ss:$4 sm:$0xff] %v134
      %v262 = vld.sshfl [vmem:[#allocation1] sm:$0xff pattern:$0x73625140]
      %v263 = vld.sshfl [vmem:[#allocation1 + $0x8] sm:$0xff pattern:$0x73625140]
      %v264 = vld.sshfl [vmem:[#allocation1 + $0x10] sm:$0xff pattern:$0x73625140]
      %v265 = vld.sshfl [vmem:[#allocation1 + $0x18] sm:$0xff pattern:$0x73625140]
      %v266 = vld.sshfl [vmem:[#allocation1 + $0x20] sm:$0xff pattern:$0x73625140]
      %v267 = vld.sshfl [vmem:[#allocation1 + $0x28] sm:$0xff pattern:$0x73625140]
      %v268 = vld.sshfl [vmem:[#allocation1 + $0x30] sm:$0xff pattern:$0x73625140]
      %v269 = vld.sshfl [vmem:[#allocation1 + $0x38] sm:$0xff pattern:$0x73625140]
      %271 = vst [vmem:[#allocation1] ss:$4 sm:$0xff] %v135
      %273 = vst [vmem:[%s260] ss:$4 sm:$0xff] %v136
      %v274 = vld.sshfl [vmem:[#allocation1] sm:$0xff pattern:$0x73625140]
      %v275 = vld.sshfl [vmem:[#allocation1 + $0x8] sm:$0xff pattern:$0x73625140]
      %v276 = vld.sshfl [vmem:[#allocation1 + $0x10] sm:$0xff pattern:$0x73625140]
      %v277 = vld.sshfl [vmem:[#allocation1 + $0x18] sm:$0xff pattern:$0x73625140]
      %v278 = vld.sshfl [vmem:[#allocation1 + $0x20] sm:$0xff pattern:$0x73625140]
      %v279 = vld.sshfl [vmem:[#allocation1 + $0x28] sm:$0xff pattern:$0x73625140]
      %v280 = vld.sshfl [vmem:[#allocation1 + $0x30] sm:$0xff pattern:$0x73625140]
      %v281 = vld.sshfl [vmem:[#allocation1 + $0x38] sm:$0xff pattern:$0x73625140]
      %283 = vst [vmem:[#allocation1] ss:$4 sm:$0xff] %v137
      %285 = vst [vmem:[%s260] ss:$4 sm:$0xff] %v138
      %v286 = vld.sshfl [vmem:[#allocation1] sm:$0xff pattern:$0x73625140]
      %v287 = vld.sshfl [vmem:[#allocation1 + $0x8] sm:$0xff pattern:$0x73625140]
      %v288 = vld.sshfl [vmem:[#allocation1 + $0x10] sm:$0xff pattern:$0x73625140]
      %v289 = vld.sshfl [vmem:[#allocation1 + $0x18] sm:$0xff pattern:$0x73625140]
      %v290 = vld.sshfl [vmem:[#allocation1 + $0x20] sm:$0xff pattern:$0x73625140]
      %v291 = vld.sshfl [vmem:[#allocation1 + $0x28] sm:$0xff pattern:$0x73625140]
      %v292 = vld.sshfl [vmem:[#allocation1 + $0x30] sm:$0xff pattern:$0x73625140]
      %v293 = vld.sshfl [vmem:[#allocation1 + $0x38] sm:$0xff pattern:$0x73625140]
      %295 = vst [vmem:[#allocation1] ss:$4 sm:$0xff] %v139
      %297 = vst [vmem:[%s260] ss:$4 sm:$0xff] %v140
      %v298 = vld.sshfl [vmem:[#allocation1] sm:$0xff pattern:$0x73625140]
      %v299 = vld.sshfl [vmem:[#allocation1 + $0x8] sm:$0xff pattern:$0x73625140]
      %v300 = vld.sshfl [vmem:[#allocation1 + $0x10] sm:$0xff pattern:$0x73625140]
      %v301 = vld.sshfl [vmem:[#allocation1 + $0x18] sm:$0xff pattern:$0x73625140]
      %v302 = vld.sshfl [vmem:[#allocation1 + $0x20] sm:$0xff pattern:$0x73625140]
      %v303 = vld.sshfl [vmem:[#allocation1 + $0x28] sm:$0xff pattern:$0x73625140]
      %v304 = vld.sshfl [vmem:[#allocation1 + $0x30] sm:$0xff pattern:$0x73625140]
      %v305 = vld.sshfl [vmem:[#allocation1 + $0x38] sm:$0xff pattern:$0x73625140]
      %vm306 = vcmask 31744
      %v308 = vsel %vm306, %v132, 0
      %vm310 = vcmask 1041408
      %v311 = vsel %vm310, %v262, 0
      %v313 = vsel %vm310, %v263, 0
      %v315 = vsel %vm310, %v264, 0
      %v317 = vsel %vm310, %v265, 0
      %v319 = vsel %vm310, %v266, 0
      %v321 = vsel %vm310, %v267, 0
      %v323 = vsel %vm310, %v268, 0
      %v325 = vsel %vm310, %v269, 0
      %v327 = vsel %vm310, %v274, 0
      %v329 = vsel %vm310, %v275, 0
      %v331 = vsel %vm310, %v276, 0
      %v333 = vsel %vm310, %v277, 0
      %v335 = vsel %vm310, %v278, 0
      %v337 = vsel %vm310, %v279, 0
      %v339 = vsel %vm310, %v280, 0
      %v341 = vsel %vm310, %v281, 0
      %v343 = vsel %vm310, %v286, 0
      %v345 = vsel %vm310, %v287, 0
      %v347 = vsel %vm310, %v288, 0
      %v349 = vsel %vm310, %v289, 0
      %v351 = vsel %vm310, %v290, 0
      %v353 = vsel %vm310, %v291, 0
      %v355 = vsel %vm310, %v292, 0
      %v357 = vsel %vm310, %v293, 0
      %v359 = vsel %vm310, %v298, 0
      %v361 = vsel %vm310, %v299, 0
      %v363 = vsel %vm310, %v300, 0
      %v365 = vsel %vm310, %v301, 0
      %v367 = vsel %vm310, %v302, 0
      %v369 = vsel %vm310, %v303, 0
      %v371 = vsel %vm310, %v304, 0
      %v373 = vsel %vm310, %v305, 0
      %375 = vmatpush.bf16.msra.mxu0 0
      %376 = vmatpush.bf16.msra.mxu0 0
      %377 = vmatpush.bf16.msra.mxu0 0
      %378 = vmatpush.bf16.msra.mxu0 0
      %379 = vmatpush.bf16.msra.mxu0 0
      %380 = vmatpush.bf16.msra.mxu0 0
      %381 = vmatpush.bf16.msra.mxu0 0
      %382 = vmatpush.bf16.msra.mxu0 %v311
      %383 = vmatmul.bf16.gmra.mxu0 %v308
      %v384 = vpop.f32.mrf.mxu0
      %v385 = vadd.f32 %v225, %v384
      %v386 = vpop.f32.mrf.mxu0
      %387 = vdwg.mxu0
      %388 = vmatpush.bf16.msra.mxu0 0
      %389 = vmatpush.bf16.msra.mxu0 0
      %390 = vmatpush.bf16.msra.mxu0 0
      %391 = vmatpush.bf16.msra.mxu0 0
      %392 = vmatpush.bf16.msra.mxu0 0
      %393 = vmatpush.bf16.msra.mxu0 0
      %394 = vmatpush.bf16.msra.mxu0 0
      %395 = vmatpush.bf16.msra.mxu0 %v313
      %396 = vmatmul.bf16.gmra.mxu0 %v308
      %v397 = vpop.f32.mrf.mxu0
      %v398 = vadd.f32 %v226, %v397
      %v399 = vpop.f32.mrf.mxu0
      %400 = vdwg.mxu0
      %401 = vmatpush.bf16.msra.mxu0 0
      %402 = vmatpush.bf16.msra.mxu0 0
      %403 = vmatpush.bf16.msra.mxu0 0
      %404 = vmatpush.bf16.msra.mxu0 0
      %405 = vmatpush.bf16.msra.mxu0 0
      %406 = vmatpush.bf16.msra.mxu0 0
      %407 = vmatpush.bf16.msra.mxu0 0
      %408 = vmatpush.bf16.msra.mxu0 %v315
      %409 = vmatmul.bf16.gmra.mxu0 %v308
      %v410 = vpop.f32.mrf.mxu0
      %v411 = vadd.f32 %v227, %v410
      %v412 = vpop.f32.mrf.mxu0
      %413 = vdwg.mxu0
      %414 = vmatpush.bf16.msra.mxu0 0
      %415 = vmatpush.bf16.msra.mxu0 0
      %416 = vmatpush.bf16.msra.mxu0 0
      %417 = vmatpush.bf16.msra.mxu0 0
      %418 = vmatpush.bf16.msra.mxu0 0
      %419 = vmatpush.bf16.msra.mxu0 0
      %420 = vmatpush.bf16.msra.mxu0 0
      %421 = vmatpush.bf16.msra.mxu0 %v317
      %422 = vmatmul.bf16.gmra.mxu0 %v308
      %v423 = vpop.f32.mrf.mxu0
      %v424 = vadd.f32 %v228, %v423
      %v425 = vpop.f32.mrf.mxu0
      %426 = vdwg.mxu0
      %427 = vmatpush.bf16.msra.mxu0 0
      %428 = vmatpush.bf16.msra.mxu0 0
      %429 = vmatpush.bf16.msra.mxu0 0
      %430 = vmatpush.bf16.msra.mxu0 0
      %431 = vmatpush.bf16.msra.mxu0 0
      %432 = vmatpush.bf16.msra.mxu0 0
      %433 = vmatpush.bf16.msra.mxu0 0
      %434 = vmatpush.bf16.msra.mxu0 %v319
      %435 = vmatmul.bf16.gmra.mxu0 %v308
      %v436 = vpop.f32.mrf.mxu0
      %v437 = vadd.f32 %v229, %v436
      %v438 = vpop.f32.mrf.mxu0
      %439 = vdwg.mxu0
      %440 = vmatpush.bf16.msra.mxu0 0
      %441 = vmatpush.bf16.msra.mxu0 0
      %442 = vmatpush.bf16.msra.mxu0 0
      %443 = vmatpush.bf16.msra.mxu0 0
      %444 = vmatpush.bf16.msra.mxu0 0
      %445 = vmatpush.bf16.msra.mxu0 0
      %446 = vmatpush.bf16.msra.mxu0 0
      %447 = vmatpush.bf16.msra.mxu0 %v321
      %448 = vmatmul.bf16.gmra.mxu0 %v308
      %v449 = vpop.f32.mrf.mxu0
      %v450 = vadd.f32 %v230, %v449
      %v451 = vpop.f32.mrf.mxu0
      %452 = vdwg.mxu0
      %453 = vmatpush.bf16.msra.mxu0 0
      %454 = vmatpush.bf16.msra.mxu0 0
      %455 = vmatpush.bf16.msra.mxu0 0
      %456 = vmatpush.bf16.msra.mxu0 0
      %457 = vmatpush.bf16.msra.mxu0 0
      %458 = vmatpush.bf16.msra.mxu0 0
      %459 = vmatpush.bf16.msra.mxu0 0
      %460 = vmatpush.bf16.msra.mxu0 %v323
      %461 = vmatmul.bf16.gmra.mxu0 %v308
      %v462 = vpop.f32.mrf.mxu0
      %v463 = vadd.f32 %v231, %v462
      %v464 = vpop.f32.mrf.mxu0
      %465 = vdwg.mxu0
      %466 = vmatpush.bf16.msra.mxu0 0
      %467 = vmatpush.bf16.msra.mxu0 0
      %468 = vmatpush.bf16.msra.mxu0 0
      %469 = vmatpush.bf16.msra.mxu0 0
      %470 = vmatpush.bf16.msra.mxu0 0
      %471 = vmatpush.bf16.msra.mxu0 0
      %472 = vmatpush.bf16.msra.mxu0 0
      %473 = vmatpush.bf16.msra.mxu0 %v325
      %474 = vmatmul.bf16.gmra.mxu0 %v308
      %v475 = vpop.f32.mrf.mxu0
      %v476 = vadd.f32 %v232, %v475
      %v477 = vpop.f32.mrf.mxu0
      %478 = vdwg.mxu0
      %479 = vmatpush.bf16.msra.mxu0 0
      %480 = vmatpush.bf16.msra.mxu0 0
      %481 = vmatpush.bf16.msra.mxu0 0
      %482 = vmatpush.bf16.msra.mxu0 0
      %483 = vmatpush.bf16.msra.mxu0 0
      %484 = vmatpush.bf16.msra.mxu0 0
      %485 = vmatpush.bf16.msra.mxu0 0
      %486 = vmatpush.bf16.msra.mxu0 %v327
      %487 = vmatmul.bf16.gmra.mxu0 %v308
      %v488 = vpop.f32.mrf.mxu0
      %v489 = vadd.f32 %v233, %v488
      %v490 = vpop.f32.mrf.mxu0
      %491 = vdwg.mxu0
      %492 = vmatpush.bf16.msra.mxu0 0
      %493 = vmatpush.bf16.msra.mxu0 0
      %494 = vmatpush.bf16.msra.mxu0 0
      %495 = vmatpush.bf16.msra.mxu0 0
      %496 = vmatpush.bf16.msra.mxu0 0
      %497 = vmatpush.bf16.msra.mxu0 0
      %498 = vmatpush.bf16.msra.mxu0 0
      %499 = vmatpush.bf16.msra.mxu0 %v329
      %500 = vmatmul.bf16.gmra.mxu0 %v308
      %v501 = vpop.f32.mrf.mxu0
      %v502 = vadd.f32 %v234, %v501
      %v503 = vpop.f32.mrf.mxu0
      %504 = vdwg.mxu0
      %505 = vmatpush.bf16.msra.mxu0 0
      %506 = vmatpush.bf16.msra.mxu0 0
      %507 = vmatpush.bf16.msra.mxu0 0
      %508 = vmatpush.bf16.msra.mxu0 0
      %509 = vmatpush.bf16.msra.mxu0 0
      %510 = vmatpush.bf16.msra.mxu0 0
      %511 = vmatpush.bf16.msra.mxu0 0
      %512 = vmatpush.bf16.msra.mxu0 %v331
      %513 = vmatmul.bf16.gmra.mxu0 %v308
      %v514 = vpop.f32.mrf.mxu0
      %v515 = vadd.f32 %v235, %v514
      %v516 = vpop.f32.mrf.mxu0
      %517 = vdwg.mxu0
      %518 = vmatpush.bf16.msra.mxu0 0
      %519 = vmatpush.bf16.msra.mxu0 0
      %520 = vmatpush.bf16.msra.mxu0 0
      %521 = vmatpush.bf16.msra.mxu0 0
      %522 = vmatpush.bf16.msra.mxu0 0
      %523 = vmatpush.bf16.msra.mxu0 0
      %524 = vmatpush.bf16.msra.mxu0 0
      %525 = vmatpush.bf16.msra.mxu0 %v333
      %526 = vmatmul.bf16.gmra.mxu0 %v308
      %v527 = vpop.f32.mrf.mxu0
      %v528 = vadd.f32 %v236, %v527
      %v529 = vpop.f32.mrf.mxu0
      %530 = vdwg.mxu0
      %531 = vmatpush.bf16.msra.mxu0 0
      %532 = vmatpush.bf16.msra.mxu0 0
      %533 = vmatpush.bf16.msra.mxu0 0
      %534 = vmatpush.bf16.msra.mxu0 0
      %535 = vmatpush.bf16.msra.mxu0 0
      %536 = vmatpush.bf16.msra.mxu0 0
      %537 = vmatpush.bf16.msra.mxu0 0
      %538 = vmatpush.bf16.msra.mxu0 %v335
      %539 = vmatmul.bf16.gmra.mxu0 %v308
      %v540 = vpop.f32.mrf.mxu0
      %v541 = vadd.f32 %v237, %v540
      %v542 = vpop.f32.mrf.mxu0
      %543 = vdwg.mxu0
      %544 = vmatpush.bf16.msra.mxu0 0
      %545 = vmatpush.bf16.msra.mxu0 0
      %546 = vmatpush.bf16.msra.mxu0 0
      %547 = vmatpush.bf16.msra.mxu0 0
      %548 = vmatpush.bf16.msra.mxu0 0
      %549 = vmatpush.bf16.msra.mxu0 0
      %550 = vmatpush.bf16.msra.mxu0 0
      %551 = vmatpush.bf16.msra.mxu0 %v337
      %552 = vmatmul.bf16.gmra.mxu0 %v308
      %v553 = vpop.f32.mrf.mxu0
      %v554 = vadd.f32 %v238, %v553
      %v555 = vpop.f32.mrf.mxu0
      %556 = vdwg.mxu0
      %557 = vmatpush.bf16.msra.mxu0 0
      %558 = vmatpush.bf16.msra.mxu0 0
      %559 = vmatpush.bf16.msra.mxu0 0
      %560 = vmatpush.bf16.msra.mxu0 0
      %561 = vmatpush.bf16.msra.mxu0 0
      %562 = vmatpush.bf16.msra.mxu0 0
      %563 = vmatpush.bf16.msra.mxu0 0
      %564 = vmatpush.bf16.msra.mxu0 %v339
      %565 = vmatmul.bf16.gmra.mxu0 %v308
      %v566 = vpop.f32.mrf.mxu0
      %v567 = vadd.f32 %v239, %v566
      %v568 = vpop.f32.mrf.mxu0
      %569 = vdwg.mxu0
      %570 = vmatpush.bf16.msra.mxu0 0
      %571 = vmatpush.bf16.msra.mxu0 0
      %572 = vmatpush.bf16.msra.mxu0 0
      %573 = vmatpush.bf16.msra.mxu0 0
      %574 = vmatpush.bf16.msra.mxu0 0
      %575 = vmatpush.bf16.msra.mxu0 0
      %576 = vmatpush.bf16.msra.mxu0 0
      %577 = vmatpush.bf16.msra.mxu0 %v341
      %578 = vmatmul.bf16.gmra.mxu0 %v308
      %v579 = vpop.f32.mrf.mxu0
      %v580 = vadd.f32 %v240, %v579
      %v581 = vpop.f32.mrf.mxu0
      %582 = vdwg.mxu0
      %583 = vmatpush.bf16.msra.mxu0 0
      %584 = vmatpush.bf16.msra.mxu0 0
      %585 = vmatpush.bf16.msra.mxu0 0
      %586 = vmatpush.bf16.msra.mxu0 0
      %587 = vmatpush.bf16.msra.mxu0 0
      %588 = vmatpush.bf16.msra.mxu0 0
      %589 = vmatpush.bf16.msra.mxu0 0
      %590 = vmatpush.bf16.msra.mxu0 %v343
      %591 = vmatmul.bf16.gmra.mxu0 %v308
      %v592 = vpop.f32.mrf.mxu0
      %v593 = vadd.f32 %v241, %v592
      %v594 = vpop.f32.mrf.mxu0
      %595 = vdwg.mxu0
      %596 = vmatpush.bf16.msra.mxu0 0
      %597 = vmatpush.bf16.msra.mxu0 0
      %598 = vmatpush.bf16.msra.mxu0 0
      %599 = vmatpush.bf16.msra.mxu0 0
      %600 = vmatpush.bf16.msra.mxu0 0
      %601 = vmatpush.bf16.msra.mxu0 0
      %602 = vmatpush.bf16.msra.mxu0 0
      %603 = vmatpush.bf16.msra.mxu0 %v345
      %604 = vmatmul.bf16.gmra.mxu0 %v308
      %v605 = vpop.f32.mrf.mxu0
      %v606 = vadd.f32 %v242, %v605
      %v607 = vpop.f32.mrf.mxu0
      %608 = vdwg.mxu0
      %609 = vmatpush.bf16.msra.mxu0 0
      %610 = vmatpush.bf16.msra.mxu0 0
      %611 = vmatpush.bf16.msra.mxu0 0
      %612 = vmatpush.bf16.msra.mxu0 0
      %613 = vmatpush.bf16.msra.mxu0 0
      %614 = vmatpush.bf16.msra.mxu0 0
      %615 = vmatpush.bf16.msra.mxu0 0
      %616 = vmatpush.bf16.msra.mxu0 %v347
      %617 = vmatmul.bf16.gmra.mxu0 %v308
      %v618 = vpop.f32.mrf.mxu0
      %v619 = vadd.f32 %v243, %v618
      %v620 = vpop.f32.mrf.mxu0
      %621 = vdwg.mxu0
      %622 = vmatpush.bf16.msra.mxu0 0
      %623 = vmatpush.bf16.msra.mxu0 0
      %624 = vmatpush.bf16.msra.mxu0 0
      %625 = vmatpush.bf16.msra.mxu0 0
      %626 = vmatpush.bf16.msra.mxu0 0
      %627 = vmatpush.bf16.msra.mxu0 0
      %628 = vmatpush.bf16.msra.mxu0 0
      %629 = vmatpush.bf16.msra.mxu0 %v349
      %630 = vmatmul.bf16.gmra.mxu0 %v308
      %v631 = vpop.f32.mrf.mxu0
      %v632 = vadd.f32 %v244, %v631
      %v633 = vpop.f32.mrf.mxu0
      %634 = vdwg.mxu0
      %635 = vmatpush.bf16.msra.mxu0 0
      %636 = vmatpush.bf16.msra.mxu0 0
      %637 = vmatpush.bf16.msra.mxu0 0
      %638 = vmatpush.bf16.msra.mxu0 0
      %639 = vmatpush.bf16.msra.mxu0 0
      %640 = vmatpush.bf16.msra.mxu0 0
      %641 = vmatpush.bf16.msra.mxu0 0
      %642 = vmatpush.bf16.msra.mxu0 %v351
      %643 = vmatmul.bf16.gmra.mxu0 %v308
      %v644 = vpop.f32.mrf.mxu0
      %v645 = vadd.f32 %v245, %v644
      %v646 = vpop.f32.mrf.mxu0
      %647 = vdwg.mxu0
      %648 = vmatpush.bf16.msra.mxu0 0
      %649 = vmatpush.bf16.msra.mxu0 0
      %650 = vmatpush.bf16.msra.mxu0 0
      %651 = vmatpush.bf16.msra.mxu0 0
      %652 = vmatpush.bf16.msra.mxu0 0
      %653 = vmatpush.bf16.msra.mxu0 0
      %654 = vmatpush.bf16.msra.mxu0 0
      %655 = vmatpush.bf16.msra.mxu0 %v353
      %656 = vmatmul.bf16.gmra.mxu0 %v308
      %v657 = vpop.f32.mrf.mxu0
      %v658 = vadd.f32 %v246, %v657
      %v659 = vpop.f32.mrf.mxu0
      %660 = vdwg.mxu0
      %661 = vmatpush.bf16.msra.mxu0 0
      %662 = vmatpush.bf16.msra.mxu0 0
      %663 = vmatpush.bf16.msra.mxu0 0
      %664 = vmatpush.bf16.msra.mxu0 0
      %665 = vmatpush.bf16.msra.mxu0 0
      %666 = vmatpush.bf16.msra.mxu0 0
      %667 = vmatpush.bf16.msra.mxu0 0
      %668 = vmatpush.bf16.msra.mxu0 %v355
      %669 = vmatmul.bf16.gmra.mxu0 %v308
      %v670 = vpop.f32.mrf.mxu0
      %v671 = vadd.f32 %v247, %v670
      %v672 = vpop.f32.mrf.mxu0
      %673 = vdwg.mxu0
      %674 = vmatpush.bf16.msra.mxu0 0
      %675 = vmatpush.bf16.msra.mxu0 0
      %676 = vmatpush.bf16.msra.mxu0 0
      %677 = vmatpush.bf16.msra.mxu0 0
      %678 = vmatpush.bf16.msra.mxu0 0
      %679 = vmatpush.bf16.msra.mxu0 0
      %680 = vmatpush.bf16.msra.mxu0 0
      %681 = vmatpush.bf16.msra.mxu0 %v357
      %682 = vmatmul.bf16.gmra.mxu0 %v308
      %v683 = vpop.f32.mrf.mxu0
      %v684 = vadd.f32 %v248, %v683
      %v685 = vpop.f32.mrf.mxu0
      %686 = vdwg.mxu0
      %687 = vmatpush.bf16.msra.mxu0 0
      %688 = vmatpush.bf16.msra.mxu0 0
      %689 = vmatpush.bf16.msra.mxu0 0
      %690 = vmatpush.bf16.msra.mxu0 0
      %691 = vmatpush.bf16.msra.mxu0 0
      %692 = vmatpush.bf16.msra.mxu0 0
      %693 = vmatpush.bf16.msra.mxu0 0
      %694 = vmatpush.bf16.msra.mxu0 %v359
      %695 = vmatmul.bf16.gmra.mxu0 %v308
      %v696 = vpop.f32.mrf.mxu0
      %v697 = vadd.f32 %v249, %v696
      %v698 = vpop.f32.mrf.mxu0
      %699 = vdwg.mxu0
      %700 = vmatpush.bf16.msra.mxu0 0
      %701 = vmatpush.bf16.msra.mxu0 0
      %702 = vmatpush.bf16.msra.mxu0 0
      %703 = vmatpush.bf16.msra.mxu0 0
      %704 = vmatpush.bf16.msra.mxu0 0
      %705 = vmatpush.bf16.msra.mxu0 0
      %706 = vmatpush.bf16.msra.mxu0 0
      %707 = vmatpush.bf16.msra.mxu0 %v361
      %708 = vmatmul.bf16.gmra.mxu0 %v308
      %v709 = vpop.f32.mrf.mxu0
      %v710 = vadd.f32 %v250, %v709
      %v711 = vpop.f32.mrf.mxu0
      %712 = vdwg.mxu0
      %713 = vmatpush.bf16.msra.mxu0 0
      %714 = vmatpush.bf16.msra.mxu0 0
      %715 = vmatpush.bf16.msra.mxu0 0
      %716 = vmatpush.bf16.msra.mxu0 0
      %717 = vmatpush.bf16.msra.mxu0 0
      %718 = vmatpush.bf16.msra.mxu0 0
      %719 = vmatpush.bf16.msra.mxu0 0
      %720 = vmatpush.bf16.msra.mxu0 %v363
      %721 = vmatmul.bf16.gmra.mxu0 %v308
      %v722 = vpop.f32.mrf.mxu0
      %v723 = vadd.f32 %v251, %v722
      %v724 = vpop.f32.mrf.mxu0
      %725 = vdwg.mxu0
      %726 = vmatpush.bf16.msra.mxu0 0
      %727 = vmatpush.bf16.msra.mxu0 0
      %728 = vmatpush.bf16.msra.mxu0 0
      %729 = vmatpush.bf16.msra.mxu0 0
      %730 = vmatpush.bf16.msra.mxu0 0
      %731 = vmatpush.bf16.msra.mxu0 0
      %732 = vmatpush.bf16.msra.mxu0 0
      %733 = vmatpush.bf16.msra.mxu0 %v365
      %734 = vmatmul.bf16.gmra.mxu0 %v308
      %v735 = vpop.f32.mrf.mxu0
      %v736 = vadd.f32 %v252, %v735
      %v737 = vpop.f32.mrf.mxu0
      %738 = vdwg.mxu0
      %739 = vmatpush.bf16.msra.mxu0 0
      %740 = vmatpush.bf16.msra.mxu0 0
      %741 = vmatpush.bf16.msra.mxu0 0
      %742 = vmatpush.bf16.msra.mxu0 0
      %743 = vmatpush.bf16.msra.mxu0 0
      %744 = vmatpush.bf16.msra.mxu0 0
      %745 = vmatpush.bf16.msra.mxu0 0
      %746 = vmatpush.bf16.msra.mxu0 %v367
      %747 = vmatmul.bf16.gmra.mxu0 %v308
      %v748 = vpop.f32.mrf.mxu0
      %v749 = vadd.f32 %v253, %v748
      %v750 = vpop.f32.mrf.mxu0
      %751 = vdwg.mxu0
      %752 = vmatpush.bf16.msra.mxu0 0
      %753 = vmatpush.bf16.msra.mxu0 0
      %754 = vmatpush.bf16.msra.mxu0 0
      %755 = vmatpush.bf16.msra.mxu0 0
      %756 = vmatpush.bf16.msra.mxu0 0
      %757 = vmatpush.bf16.msra.mxu0 0
      %758 = vmatpush.bf16.msra.mxu0 0
      %759 = vmatpush.bf16.msra.mxu0 %v369
      %760 = vmatmul.bf16.gmra.mxu0 %v308
      %v761 = vpop.f32.mrf.mxu0
      %v762 = vadd.f32 %v254, %v761
      %v763 = vpop.f32.mrf.mxu0
      %764 = vdwg.mxu0
      %765 = vmatpush.bf16.msra.mxu0 0
      %766 = vmatpush.bf16.msra.mxu0 0
      %767 = vmatpush.bf16.msra.mxu0 0
      %768 = vmatpush.bf16.msra.mxu0 0
      %769 = vmatpush.bf16.msra.mxu0 0
      %770 = vmatpush.bf16.msra.mxu0 0
      %771 = vmatpush.bf16.msra.mxu0 0
      %772 = vmatpush.bf16.msra.mxu0 %v371
      %773 = vmatmul.bf16.gmra.mxu0 %v308
      %v774 = vpop.f32.mrf.mxu0
      %v775 = vadd.f32 %v255, %v774
      %v776 = vpop.f32.mrf.mxu0
      %777 = vdwg.mxu0
      %778 = vmatpush.bf16.msra.mxu0 0
      %779 = vmatpush.bf16.msra.mxu0 0
      %780 = vmatpush.bf16.msra.mxu0 0
      %781 = vmatpush.bf16.msra.mxu0 0
      %782 = vmatpush.bf16.msra.mxu0 0
      %783 = vmatpush.bf16.msra.mxu0 0
      %784 = vmatpush.bf16.msra.mxu0 0
      %785 = vmatpush.bf16.msra.mxu0 %v373
      %786 = vmatmul.bf16.gmra.mxu0 %v308
      %v787 = vpop.f32.mrf.mxu0
      %v788 = vadd.f32 %v256, %v787
      %v789 = vpop.f32.mrf.mxu0
      %790 = vdwg.mxu0
      %v791 = vmax.f32 %v385, 0.0
      %v792 = vmax.f32 %v398, 0.0
      %v793 = vmax.f32 %v411, 0.0
      %v794 = vmax.f32 %v424, 0.0
      %v795 = vmax.f32 %v437, 0.0
      %v796 = vmax.f32 %v450, 0.0
      %v797 = vmax.f32 %v463, 0.0
      %v798 = vmax.f32 %v476, 0.0
      %v799 = vmax.f32 %v489, 0.0
      %v800 = vmax.f32 %v502, 0.0
      %v801 = vmax.f32 %v515, 0.0
      %v802 = vmax.f32 %v528, 0.0
      %v803 = vmax.f32 %v541, 0.0
      %v804 = vmax.f32 %v554, 0.0
      %v805 = vmax.f32 %v567, 0.0
      %v806 = vmax.f32 %v580, 0.0
      %v807 = vmax.f32 %v593, 0.0
      %v808 = vmax.f32 %v606, 0.0
      %v809 = vmax.f32 %v619, 0.0
      %v810 = vmax.f32 %v632, 0.0
      %v811 = vmax.f32 %v645, 0.0
      %v812 = vmax.f32 %v658, 0.0
      %v813 = vmax.f32 %v671, 0.0
      %v814 = vmax.f32 %v684, 0.0
      %v815 = vmax.f32 %v697, 0.0
      %v816 = vmax.f32 %v710, 0.0
      %v817 = vmax.f32 %v723, 0.0
      %v818 = vmax.f32 %v736, 0.0
      %v819 = vmax.f32 %v749, 0.0
      %v820 = vmax.f32 %v762, 0.0
      %v821 = vmax.f32 %v775, 0.0
      %v822 = vmax.f32 %v788, 0.0
      %v823 = vpack.c.bf16 %v791, %v791
      %v824 = vpack.c.bf16 %v792, %v792
      %v825 = vpack.c.bf16 %v793, %v793
      %v826 = vpack.c.bf16 %v794, %v794
      %v827 = vpack.c.bf16 %v795, %v795
      %v828 = vpack.c.bf16 %v796, %v796
      %v829 = vpack.c.bf16 %v797, %v797
      %v830 = vpack.c.bf16 %v798, %v798
      %v831 = vpack.c.bf16 %v799, %v799
      %v832 = vpack.c.bf16 %v800, %v800
      %v833 = vpack.c.bf16 %v801, %v801
      %v834 = vpack.c.bf16 %v802, %v802
      %v835 = vpack.c.bf16 %v803, %v803
      %v836 = vpack.c.bf16 %v804, %v804
      %v837 = vpack.c.bf16 %v805, %v805
      %v838 = vpack.c.bf16 %v806, %v806
      %v839 = vpack.c.bf16 %v807, %v807
      %v840 = vpack.c.bf16 %v808, %v808
      %v841 = vpack.c.bf16 %v809, %v809
      %v842 = vpack.c.bf16 %v810, %v810
      %v843 = vpack.c.bf16 %v811, %v811
      %v844 = vpack.c.bf16 %v812, %v812
      %v845 = vpack.c.bf16 %v813, %v813
      %v846 = vpack.c.bf16 %v814, %v814
      %v847 = vpack.c.bf16 %v815, %v815
      %v848 = vpack.c.bf16 %v816, %v816
      %v849 = vpack.c.bf16 %v817, %v817
      %v850 = vpack.c.bf16 %v818, %v818
      %v851 = vpack.c.bf16 %v819, %v819
      %v852 = vpack.c.bf16 %v820, %v820
      %v853 = vpack.c.bf16 %v821, %v821
      %v854 = vpack.c.bf16 %v822, %v822
      %v855 = vld [vmem:[#allocation9] sm:$0xf]
      %v856 = vld [vmem:[#allocation9 + $0x4] sm:$0xf]
      %v857 = vld [vmem:[#allocation9 + $0x8] sm:$0xf]
      %v858 = vld [vmem:[#allocation9 + $0xc] sm:$0xf]
      %v859 = vld [vmem:[#allocation9 + $0x10] sm:$0xf]
      %v860 = vld [vmem:[#allocation9 + $0x14] sm:$0xf]
      %v861 = vld [vmem:[#allocation9 + $0x18] sm:$0xf]
      %v862 = vld [vmem:[#allocation9 + $0x1c] sm:$0xf]
      %v863 = vld [vmem:[#allocation9 + $0x20] sm:$0xf]
      %v864 = vld [vmem:[#allocation9 + $0x24] sm:$0xf]
      %v865 = vld [vmem:[#allocation9 + $0x28] sm:$0xf]
      %v866 = vld [vmem:[#allocation9 + $0x2c] sm:$0xf]
      %v867 = vld [vmem:[#allocation9 + $0x30] sm:$0xf]
      %v868 = vld [vmem:[#allocation9 + $0x34] sm:$0xf]
      %v869 = vld [vmem:[#allocation9 + $0x38] sm:$0xf]
      %v870 = vld [vmem:[#allocation9 + $0x3c] sm:$0xf]
      %v871 = vld [vmem:[#allocation9 + $0x40] sm:$0xf]
      %v872 = vld [vmem:[#allocation9 + $0x44] sm:$0xf]
      %v873 = vld [vmem:[#allocation9 + $0x48] sm:$0xf]
      %v874 = vld [vmem:[#allocation9 + $0x4c] sm:$0xf]
      %v875 = vld [vmem:[#allocation9 + $0x50] sm:$0xf]
      %v876 = vld [vmem:[#allocation9 + $0x54] sm:$0xf]
      %v877 = vld [vmem:[#allocation9 + $0x58] sm:$0xf]
      %v878 = vld [vmem:[#allocation9 + $0x5c] sm:$0xf]
      %v879 = vld [vmem:[#allocation9 + $0x60] sm:$0xf]
      %v880 = vld [vmem:[#allocation9 + $0x64] sm:$0xf]
      %v881 = vld [vmem:[#allocation9 + $0x68] sm:$0xf]
      %v882 = vld [vmem:[#allocation9 + $0x6c] sm:$0xf]
      %v883 = vld [vmem:[#allocation9 + $0x70] sm:$0xf]
      %v884 = vld [vmem:[#allocation9 + $0x74] sm:$0xf]
      %v885 = vld [vmem:[#allocation9 + $0x78] sm:$0xf]
      %v886 = vld [vmem:[#allocation9 + $0x7c] sm:$0xf]
      %v887 = vld [vmem:[#allocation9 + $0x80] sm:$0xf]
      %v888 = vld [vmem:[#allocation9 + $0x84] sm:$0xf]
      %v889 = vld [vmem:[#allocation9 + $0x88] sm:$0xf]
      %v890 = vld [vmem:[#allocation9 + $0x8c] sm:$0xf]
      %v891 = vld [vmem:[#allocation9 + $0x90] sm:$0xf]
      %v892 = vld [vmem:[#allocation9 + $0x94] sm:$0xf]
      %v893 = vld [vmem:[#allocation9 + $0x98] sm:$0xf]
      %v894 = vld [vmem:[#allocation9 + $0x9c] sm:$0xf]
      %v895 = vld [vmem:[#allocation9 + $0xa0] sm:$0xf]
      %v896 = vld [vmem:[#allocation9 + $0xa4] sm:$0xf]
      %v897 = vld [vmem:[#allocation9 + $0xa8] sm:$0xf]
      %v898 = vld [vmem:[#allocation9 + $0xac] sm:$0xf]
      %v899 = vld [vmem:[#allocation9 + $0xb0] sm:$0xf]
      %v900 = vld [vmem:[#allocation9 + $0xb4] sm:$0xf]
      %v901 = vld [vmem:[#allocation9 + $0xb8] sm:$0xf]
      %v902 = vld [vmem:[#allocation9 + $0xbc] sm:$0xf]
      %v903 = vld [vmem:[#allocation9 + $0xc0] sm:$0xf]
      %v904 = vld [vmem:[#allocation9 + $0xc4] sm:$0xf]
      %v905 = vld [vmem:[#allocation9 + $0xc8] sm:$0xf]
      %v906 = vld [vmem:[#allocation9 + $0xcc] sm:$0xf]
      %v907 = vld [vmem:[#allocation9 + $0xd0] sm:$0xf]
      %v908 = vld [vmem:[#allocation9 + $0xd4] sm:$0xf]
      %v909 = vld [vmem:[#allocation9 + $0xd8] sm:$0xf]
      %v910 = vld [vmem:[#allocation9 + $0xdc] sm:$0xf]
      %v911 = vld [vmem:[#allocation9 + $0xe0] sm:$0xf]
      %v912 = vld [vmem:[#allocation9 + $0xe4] sm:$0xf]
      %v913 = vld [vmem:[#allocation9 + $0xe8] sm:$0xf]
      %v914 = vld [vmem:[#allocation9 + $0xec] sm:$0xf]
      %v915 = vld [vmem:[#allocation9 + $0xf0] sm:$0xf]
      %v916 = vld [vmem:[#allocation9 + $0xf4] sm:$0xf]
      %v917 = vld [vmem:[#allocation9 + $0xf8] sm:$0xf]
      %v918 = vld [vmem:[#allocation9 + $0xfc] sm:$0xf]
      %v919 = vld [vmem:[#allocation9 + $0x100] sm:$0xf]
      %v920 = vld [vmem:[#allocation9 + $0x104] sm:$0xf]
      %v921 = vld [vmem:[#allocation9 + $0x108] sm:$0xf]
      %v922 = vld [vmem:[#allocation9 + $0x10c] sm:$0xf]
      %v923 = vld [vmem:[#allocation9 + $0x110] sm:$0xf]
      %v924 = vld [vmem:[#allocation9 + $0x114] sm:$0xf]
      %v925 = vld [vmem:[#allocation9 + $0x118] sm:$0xf]
      %v926 = vld [vmem:[#allocation9 + $0x11c] sm:$0xf]
      %v927 = vld [vmem:[#allocation9 + $0x120] sm:$0xf]
      %v928 = vld [vmem:[#allocation9 + $0x124] sm:$0xf]
      %v929 = vld [vmem:[#allocation9 + $0x128] sm:$0xf]
      %v930 = vld [vmem:[#allocation9 + $0x12c] sm:$0xf]
      %v931 = vld [vmem:[#allocation9 + $0x130] sm:$0xf]
      %v932 = vld [vmem:[#allocation9 + $0x134] sm:$0xf]
      %v933 = vld [vmem:[#allocation9 + $0x138] sm:$0xf]
      %v934 = vld [vmem:[#allocation9 + $0x13c] sm:$0xf]
      %v935 = vld [vmem:[#allocation9 + $0x140] sm:$0xf]
      %v936 = vld [vmem:[#allocation9 + $0x144] sm:$0xf]
      %v937 = vld [vmem:[#allocation9 + $0x148] sm:$0xf]
      %v938 = vld [vmem:[#allocation9 + $0x14c] sm:$0xf]
      %v939 = vld [vmem:[#allocation9 + $0x150] sm:$0xf]
      %v940 = vld [vmem:[#allocation9 + $0x154] sm:$0xf]
      %v941 = vld [vmem:[#allocation9 + $0x158] sm:$0xf]
      %v942 = vld [vmem:[#allocation9 + $0x15c] sm:$0xf]
      %v943 = vld [vmem:[#allocation9 + $0x160] sm:$0xf]
      %v944 = vld [vmem:[#allocation9 + $0x164] sm:$0xf]
      %v945 = vld [vmem:[#allocation9 + $0x168] sm:$0xf]
      %v946 = vld [vmem:[#allocation9 + $0x16c] sm:$0xf]
      %v947 = vld [vmem:[#allocation9 + $0x170] sm:$0xf]
      %v948 = vld [vmem:[#allocation9 + $0x174] sm:$0xf]
      %v949 = vld [vmem:[#allocation9 + $0x178] sm:$0xf]
      %v950 = vld [vmem:[#allocation9 + $0x17c] sm:$0xf]
      %v951 = vld [vmem:[#allocation9 + $0x180] sm:$0xf]
      %v952 = vld [vmem:[#allocation9 + $0x184] sm:$0xf]
      %v953 = vld [vmem:[#allocation9 + $0x188] sm:$0xf]
      %v954 = vld [vmem:[#allocation9 + $0x18c] sm:$0xf]
      %v955 = vld [vmem:[#allocation9 + $0x190] sm:$0xf]
      %v956 = vld [vmem:[#allocation9 + $0x194] sm:$0xf]
      %v957 = vld [vmem:[#allocation9 + $0x198] sm:$0xf]
      %v958 = vld [vmem:[#allocation9 + $0x19c] sm:$0xf]
      %v959 = vld [vmem:[#allocation9 + $0x1a0] sm:$0xf]
      %v960 = vld [vmem:[#allocation9 + $0x1a4] sm:$0xf]
      %v961 = vld [vmem:[#allocation9 + $0x1a8] sm:$0xf]
      %v962 = vld [vmem:[#allocation9 + $0x1ac] sm:$0xf]
      %v963 = vld [vmem:[#allocation9 + $0x1b0] sm:$0xf]
      %v964 = vld [vmem:[#allocation9 + $0x1b4] sm:$0xf]
      %v965 = vld [vmem:[#allocation9 + $0x1b8] sm:$0xf]
      %v966 = vld [vmem:[#allocation9 + $0x1bc] sm:$0xf]
      %v967 = vld [vmem:[#allocation9 + $0x1c0] sm:$0xf]
      %v968 = vld [vmem:[#allocation9 + $0x1c4] sm:$0xf]
      %v969 = vld [vmem:[#allocation9 + $0x1c8] sm:$0xf]
      %v970 = vld [vmem:[#allocation9 + $0x1cc] sm:$0xf]
      %v971 = vld [vmem:[#allocation9 + $0x1d0] sm:$0xf]
      %v972 = vld [vmem:[#allocation9 + $0x1d4] sm:$0xf]
      %v973 = vld [vmem:[#allocation9 + $0x1d8] sm:$0xf]
      %v974 = vld [vmem:[#allocation9 + $0x1dc] sm:$0xf]
      %v975 = vld [vmem:[#allocation9 + $0x1e0] sm:$0xf]
      %v976 = vld [vmem:[#allocation9 + $0x1e4] sm:$0xf]
      %v977 = vld [vmem:[#allocation9 + $0x1e8] sm:$0xf]
      %v978 = vld [vmem:[#allocation9 + $0x1ec] sm:$0xf]
      %v979 = vld [vmem:[#allocation9 + $0x1f0] sm:$0xf]
      %v980 = vld [vmem:[#allocation9 + $0x1f4] sm:$0xf]
      %v981 = vld [vmem:[#allocation9 + $0x1f8] sm:$0xf]
      %v982 = vld [vmem:[#allocation9 + $0x1fc] sm:$0xf]
      %v983 = vld [vmem:[#allocation9 + $0x200] sm:$0xf]
      %v984 = vld [vmem:[#allocation9 + $0x204] sm:$0xf]
      %v985 = vld [vmem:[#allocation9 + $0x208] sm:$0xf]
      %v986 = vld [vmem:[#allocation9 + $0x20c] sm:$0xf]
      %v987 = vld [vmem:[#allocation9 + $0x210] sm:$0xf]
      %v988 = vld [vmem:[#allocation9 + $0x214] sm:$0xf]
      %v989 = vld [vmem:[#allocation9 + $0x218] sm:$0xf]
      %v990 = vld [vmem:[#allocation9 + $0x21c] sm:$0xf]
      %v991 = vld [vmem:[#allocation9 + $0x220] sm:$0xf]
      %v992 = vld [vmem:[#allocation9 + $0x224] sm:$0xf]
      %v993 = vld [vmem:[#allocation9 + $0x228] sm:$0xf]
      %v994 = vld [vmem:[#allocation9 + $0x22c] sm:$0xf]
      %v995 = vld [vmem:[#allocation9 + $0x230] sm:$0xf]
      %v996 = vld [vmem:[#allocation9 + $0x234] sm:$0xf]
      %v997 = vld [vmem:[#allocation9 + $0x238] sm:$0xf]
      %v998 = vld [vmem:[#allocation9 + $0x23c] sm:$0xf]
      %v999 = vld [vmem:[#allocation9 + $0x240] sm:$0xf]
      %v1000 = vld [vmem:[#allocation9 + $0x244] sm:$0xf]
      %v1001 = vld [vmem:[#allocation9 + $0x248] sm:$0xf]
      %v1002 = vld [vmem:[#allocation9 + $0x24c] sm:$0xf]
      %v1003 = vld [vmem:[#allocation9 + $0x250] sm:$0xf]
      %v1004 = vld [vmem:[#allocation9 + $0x254] sm:$0xf]
      %v1005 = vld [vmem:[#allocation9 + $0x258] sm:$0xf]
      %v1006 = vld [vmem:[#allocation9 + $0x25c] sm:$0xf]
      %v1007 = vld [vmem:[#allocation9 + $0x260] sm:$0xf]
      %v1008 = vld [vmem:[#allocation9 + $0x264] sm:$0xf]
      %v1009 = vld [vmem:[#allocation9 + $0x268] sm:$0xf]
      %v1010 = vld [vmem:[#allocation9 + $0x26c] sm:$0xf]
      %v1011 = vld [vmem:[#allocation9 + $0x270] sm:$0xf]
      %v1012 = vld [vmem:[#allocation9 + $0x274] sm:$0xf]
      %v1013 = vld [vmem:[#allocation9 + $0x278] sm:$0xf]
      %v1014 = vld [vmem:[#allocation9 + $0x27c] sm:$0xf]
      %v1015 = vld [vmem:[#allocation9 + $0x280] sm:$0xf]
      %v1016 = vld [vmem:[#allocation9 + $0x284] sm:$0xf]
      %v1017 = vld [vmem:[#allocation9 + $0x288] sm:$0xf]
      %v1018 = vld [vmem:[#allocation9 + $0x28c] sm:$0xf]
      %v1019 = vld [vmem:[#allocation9 + $0x290] sm:$0xf]
      %v1020 = vld [vmem:[#allocation9 + $0x294] sm:$0xf]
      %v1021 = vld [vmem:[#allocation9 + $0x298] sm:$0xf]
      %v1022 = vld [vmem:[#allocation9 + $0x29c] sm:$0xf]
      %v1023 = vld [vmem:[#allocation9 + $0x2a0] sm:$0xf]
      %v1024 = vld [vmem:[#allocation9 + $0x2a4] sm:$0xf]
      %v1025 = vld [vmem:[#allocation9 + $0x2a8] sm:$0xf]
      %v1026 = vld [vmem:[#allocation9 + $0x2ac] sm:$0xf]
      %v1027 = vld [vmem:[#allocation9 + $0x2b0] sm:$0xf]
      %v1028 = vld [vmem:[#allocation9 + $0x2b4] sm:$0xf]
      %v1029 = vld [vmem:[#allocation9 + $0x2b8] sm:$0xf]
      %v1030 = vld [vmem:[#allocation9 + $0x2bc] sm:$0xf]
      %v1031 = vld [vmem:[#allocation9 + $0x2c0] sm:$0xf]
      %v1032 = vld [vmem:[#allocation9 + $0x2c4] sm:$0xf]
      %v1033 = vld [vmem:[#allocation9 + $0x2c8] sm:$0xf]
      %v1034 = vld [vmem:[#allocation9 + $0x2cc] sm:$0xf]
      %v1035 = vld [vmem:[#allocation9 + $0x2d0] sm:$0xf]
      %v1036 = vld [vmem:[#allocation9 + $0x2d4] sm:$0xf]
      %v1037 = vld [vmem:[#allocation9 + $0x2d8] sm:$0xf]
      %v1038 = vld [vmem:[#allocation9 + $0x2dc] sm:$0xf]
      %v1039 = vld [vmem:[#allocation9 + $0x2e0] sm:$0xf]
      %v1040 = vld [vmem:[#allocation9 + $0x2e4] sm:$0xf]
      %v1041 = vld [vmem:[#allocation9 + $0x2e8] sm:$0xf]
      %v1042 = vld [vmem:[#allocation9 + $0x2ec] sm:$0xf]
      %v1043 = vld [vmem:[#allocation9 + $0x2f0] sm:$0xf]
      %v1044 = vld [vmem:[#allocation9 + $0x2f4] sm:$0xf]
      %v1045 = vld [vmem:[#allocation9 + $0x2f8] sm:$0xf]
      %v1046 = vld [vmem:[#allocation9 + $0x2fc] sm:$0xf]
      %v1047 = vld [vmem:[#allocation9 + $0x300] sm:$0xf]
      %v1048 = vld [vmem:[#allocation9 + $0x304] sm:$0xf]
      %v1049 = vld [vmem:[#allocation9 + $0x308] sm:$0xf]
      %v1050 = vld [vmem:[#allocation9 + $0x30c] sm:$0xf]
      %v1051 = vld [vmem:[#allocation9 + $0x310] sm:$0xf]
      %v1052 = vld [vmem:[#allocation9 + $0x314] sm:$0xf]
      %v1053 = vld [vmem:[#allocation9 + $0x318] sm:$0xf]
      %v1054 = vld [vmem:[#allocation9 + $0x31c] sm:$0xf]
      %v1055 = vld [vmem:[#allocation9 + $0x320] sm:$0xf]
      %v1056 = vld [vmem:[#allocation9 + $0x324] sm:$0xf]
      %v1057 = vld [vmem:[#allocation9 + $0x328] sm:$0xf]
      %v1058 = vld [vmem:[#allocation9 + $0x32c] sm:$0xf]
      %v1059 = vld [vmem:[#allocation9 + $0x330] sm:$0xf]
      %v1060 = vld [vmem:[#allocation9 + $0x334] sm:$0xf]
      %v1061 = vld [vmem:[#allocation9 + $0x338] sm:$0xf]
      %v1062 = vld [vmem:[#allocation9 + $0x33c] sm:$0xf]
      %v1063 = vld [vmem:[#allocation9 + $0x340] sm:$0xf]
      %v1064 = vld [vmem:[#allocation9 + $0x344] sm:$0xf]
      %v1065 = vld [vmem:[#allocation9 + $0x348] sm:$0xf]
      %v1066 = vld [vmem:[#allocation9 + $0x34c] sm:$0xf]
      %v1067 = vld [vmem:[#allocation9 + $0x350] sm:$0xf]
      %v1068 = vld [vmem:[#allocation9 + $0x354] sm:$0xf]
      %v1069 = vld [vmem:[#allocation9 + $0x358] sm:$0xf]
      %v1070 = vld [vmem:[#allocation9 + $0x35c] sm:$0xf]
      %v1071 = vld [vmem:[#allocation9 + $0x360] sm:$0xf]
      %v1072 = vld [vmem:[#allocation9 + $0x364] sm:$0xf]
      %v1073 = vld [vmem:[#allocation9 + $0x368] sm:$0xf]
      %v1074 = vld [vmem:[#allocation9 + $0x36c] sm:$0xf]
      %v1075 = vld [vmem:[#allocation9 + $0x370] sm:$0xf]
      %v1076 = vld [vmem:[#allocation9 + $0x374] sm:$0xf]
      %v1077 = vld [vmem:[#allocation9 + $0x378] sm:$0xf]
      %v1078 = vld [vmem:[#allocation9 + $0x37c] sm:$0xf]
      %v1079 = vld [vmem:[#allocation9 + $0x380] sm:$0xf]
      %v1080 = vld [vmem:[#allocation9 + $0x384] sm:$0xf]
      %v1081 = vld [vmem:[#allocation9 + $0x388] sm:$0xf]
      %v1082 = vld [vmem:[#allocation9 + $0x38c] sm:$0xf]
      %v1083 = vld [vmem:[#allocation9 + $0x390] sm:$0xf]
      %v1084 = vld [vmem:[#allocation9 + $0x394] sm:$0xf]
      %v1085 = vld [vmem:[#allocation9 + $0x398] sm:$0xf]
      %v1086 = vld [vmem:[#allocation9 + $0x39c] sm:$0xf]
      %v1087 = vld [vmem:[#allocation9 + $0x3a0] sm:$0xf]
      %v1088 = vld [vmem:[#allocation9 + $0x3a4] sm:$0xf]
      %v1089 = vld [vmem:[#allocation9 + $0x3a8] sm:$0xf]
      %v1090 = vld [vmem:[#allocation9 + $0x3ac] sm:$0xf]
      %v1091 = vld [vmem:[#allocation9 + $0x3b0] sm:$0xf]
      %v1092 = vld [vmem:[#allocation9 + $0x3b4] sm:$0xf]
      %v1093 = vld [vmem:[#allocation9 + $0x3b8] sm:$0xf]
      %v1094 = vld [vmem:[#allocation9 + $0x3bc] sm:$0xf]
      %v1095 = vld [vmem:[#allocation9 + $0x3c0] sm:$0xf]
      %v1096 = vld [vmem:[#allocation9 + $0x3c4] sm:$0xf]
      %v1097 = vld [vmem:[#allocation9 + $0x3c8] sm:$0xf]
      %v1098 = vld [vmem:[#allocation9 + $0x3cc] sm:$0xf]
      %v1099 = vld [vmem:[#allocation9 + $0x3d0] sm:$0xf]
      %v1100 = vld [vmem:[#allocation9 + $0x3d4] sm:$0xf]
      %v1101 = vld [vmem:[#allocation9 + $0x3d8] sm:$0xf]
      %v1102 = vld [vmem:[#allocation9 + $0x3dc] sm:$0xf]
      %v1103 = vld [vmem:[#allocation9 + $0x3e0] sm:$0xf]
      %v1104 = vld [vmem:[#allocation9 + $0x3e4] sm:$0xf]
      %v1105 = vld [vmem:[#allocation9 + $0x3e8] sm:$0xf]
      %v1106 = vld [vmem:[#allocation9 + $0x3ec] sm:$0xf]
      %v1107 = vld [vmem:[#allocation9 + $0x3f0] sm:$0xf]
      %v1108 = vld [vmem:[#allocation9 + $0x3f4] sm:$0xf]
      %v1109 = vld [vmem:[#allocation9 + $0x3f8] sm:$0xf]
      %v1110 = vld [vmem:[#allocation9 + $0x3fc] sm:$0xf]
      %v1111 = vld [vmem:[#allocation9 + $0x400] sm:$0xf]
      %v1112 = vld [vmem:[#allocation9 + $0x404] sm:$0xf]
      %v1113 = vld [vmem:[#allocation9 + $0x408] sm:$0xf]
      %v1114 = vld [vmem:[#allocation9 + $0x40c] sm:$0xf]
      %v1115 = vld [vmem:[#allocation9 + $0x410] sm:$0xf]
      %v1116 = vld [vmem:[#allocation9 + $0x414] sm:$0xf]
      %v1117 = vld [vmem:[#allocation9 + $0x418] sm:$0xf]
      %v1118 = vld [vmem:[#allocation9 + $0x41c] sm:$0xf]
      %v1119 = vld [vmem:[#allocation9 + $0x420] sm:$0xf]
      %v1120 = vld [vmem:[#allocation9 + $0x424] sm:$0xf]
      %v1121 = vld [vmem:[#allocation9 + $0x428] sm:$0xf]
      %v1122 = vld [vmem:[#allocation9 + $0x42c] sm:$0xf]
      %v1123 = vld [vmem:[#allocation9 + $0x430] sm:$0xf]
      %v1124 = vld [vmem:[#allocation9 + $0x434] sm:$0xf]
      %v1125 = vld [vmem:[#allocation9 + $0x438] sm:$0xf]
      %v1126 = vld [vmem:[#allocation9 + $0x43c] sm:$0xf]
      %v1127 = vld [vmem:[#allocation9 + $0x440] sm:$0xf]
      %v1128 = vld [vmem:[#allocation9 + $0x444] sm:$0xf]
      %v1129 = vld [vmem:[#allocation9 + $0x448] sm:$0xf]
      %v1130 = vld [vmem:[#allocation9 + $0x44c] sm:$0xf]
      %v1131 = vld [vmem:[#allocation9 + $0x450] sm:$0xf]
      %v1132 = vld [vmem:[#allocation9 + $0x454] sm:$0xf]
      %v1133 = vld [vmem:[#allocation9 + $0x458] sm:$0xf]
      %v1134 = vld [vmem:[#allocation9 + $0x45c] sm:$0xf]
      %v1135 = vld [vmem:[#allocation9 + $0x460] sm:$0xf]
      %v1136 = vld [vmem:[#allocation9 + $0x464] sm:$0xf]
      %v1137 = vld [vmem:[#allocation9 + $0x468] sm:$0xf]
      %v1138 = vld [vmem:[#allocation9 + $0x46c] sm:$0xf]
      %v1139 = vld [vmem:[#allocation9 + $0x470] sm:$0xf]
      %v1140 = vld [vmem:[#allocation9 + $0x474] sm:$0xf]
      %v1141 = vld [vmem:[#allocation9 + $0x478] sm:$0xf]
      %v1142 = vld [vmem:[#allocation9 + $0x47c] sm:$0xf]
      %v1143 = vld [vmem:[#allocation9 + $0x480] sm:$0xf]
      %v1144 = vld [vmem:[#allocation9 + $0x484] sm:$0xf]
      %v1145 = vld [vmem:[#allocation9 + $0x488] sm:$0xf]
      %v1146 = vld [vmem:[#allocation9 + $0x48c] sm:$0xf]
      %v1147 = vld [vmem:[#allocation9 + $0x490] sm:$0xf]
      %v1148 = vld [vmem:[#allocation9 + $0x494] sm:$0xf]
      %v1149 = vld [vmem:[#allocation9 + $0x498] sm:$0xf]
      %v1150 = vld [vmem:[#allocation9 + $0x49c] sm:$0xf]
      %v1151 = vld [vmem:[#allocation9 + $0x4a0] sm:$0xf]
      %v1152 = vld [vmem:[#allocation9 + $0x4a4] sm:$0xf]
      %v1153 = vld [vmem:[#allocation9 + $0x4a8] sm:$0xf]
      %v1154 = vld [vmem:[#allocation9 + $0x4ac] sm:$0xf]
      %v1155 = vld [vmem:[#allocation9 + $0x4b0] sm:$0xf]
      %v1156 = vld [vmem:[#allocation9 + $0x4b4] sm:$0xf]
      %v1157 = vld [vmem:[#allocation9 + $0x4b8] sm:$0xf]
      %v1158 = vld [vmem:[#allocation9 + $0x4bc] sm:$0xf]
      %v1159 = vld [vmem:[#allocation9 + $0x4c0] sm:$0xf]
      %v1160 = vld [vmem:[#allocation9 + $0x4c4] sm:$0xf]
      %v1161 = vld [vmem:[#allocation9 + $0x4c8] sm:$0xf]
      %v1162 = vld [vmem:[#allocation9 + $0x4cc] sm:$0xf]
      %v1163 = vld [vmem:[#allocation9 + $0x4d0] sm:$0xf]
      %v1164 = vld [vmem:[#allocation9 + $0x4d4] sm:$0xf]
      %v1165 = vld [vmem:[#allocation9 + $0x4d8] sm:$0xf]
      %v1166 = vld [vmem:[#allocation9 + $0x4dc] sm:$0xf]
      %v1167 = vld [vmem:[#allocation9 + $0x4e0] sm:$0xf]
      %v1168 = vld [vmem:[#allocation9 + $0x4e4] sm:$0xf]
      %v1169 = vld [vmem:[#allocation9 + $0x4e8] sm:$0xf]
      %v1170 = vld [vmem:[#allocation9 + $0x4ec] sm:$0xf]
      %v1171 = vld [vmem:[#allocation9 + $0x4f0] sm:$0xf]
      %v1172 = vld [vmem:[#allocation9 + $0x4f4] sm:$0xf]
      %v1173 = vld [vmem:[#allocation9 + $0x4f8] sm:$0xf]
      %v1174 = vld [vmem:[#allocation9 + $0x4fc] sm:$0xf]
      %v1175 = vld [vmem:[#allocation9 + $0x500] sm:$0xf]
      %v1176 = vld [vmem:[#allocation9 + $0x504] sm:$0xf]
      %v1177 = vld [vmem:[#allocation9 + $0x508] sm:$0xf]
      %v1178 = vld [vmem:[#allocation9 + $0x50c] sm:$0xf]
      %v1179 = vld [vmem:[#allocation9 + $0x510] sm:$0xf]
      %v1180 = vld [vmem:[#allocation9 + $0x514] sm:$0xf]
      %v1181 = vld [vmem:[#allocation9 + $0x518] sm:$0xf]
      %v1182 = vld [vmem:[#allocation9 + $0x51c] sm:$0xf]
      %v1183 = vld [vmem:[#allocation9 + $0x520] sm:$0xf]
      %v1184 = vld [vmem:[#allocation9 + $0x524] sm:$0xf]
      %v1185 = vld [vmem:[#allocation9 + $0x528] sm:$0xf]
      %v1186 = vld [vmem:[#allocation9 + $0x52c] sm:$0xf]
      %v1187 = vld [vmem:[#allocation9 + $0x530] sm:$0xf]
      %v1188 = vld [vmem:[#allocation9 + $0x534] sm:$0xf]
      %v1189 = vld [vmem:[#allocation9 + $0x538] sm:$0xf]
      %v1190 = vld [vmem:[#allocation9 + $0x53c] sm:$0xf]
      %v1191 = vld [vmem:[#allocation9 + $0x540] sm:$0xf]
      %v1192 = vld [vmem:[#allocation9 + $0x544] sm:$0xf]
      %v1193 = vld [vmem:[#allocation9 + $0x548] sm:$0xf]
      %v1194 = vld [vmem:[#allocation9 + $0x54c] sm:$0xf]
      %v1195 = vld [vmem:[#allocation9 + $0x550] sm:$0xf]
      %v1196 = vld [vmem:[#allocation9 + $0x554] sm:$0xf]
      %v1197 = vld [vmem:[#allocation9 + $0x558] sm:$0xf]
      %v1198 = vld [vmem:[#allocation9 + $0x55c] sm:$0xf]
      %v1199 = vld [vmem:[#allocation9 + $0x560] sm:$0xf]
      %v1200 = vld [vmem:[#allocation9 + $0x564] sm:$0xf]
      %v1201 = vld [vmem:[#allocation9 + $0x568] sm:$0xf]
      %v1202 = vld [vmem:[#allocation9 + $0x56c] sm:$0xf]
      %v1203 = vld [vmem:[#allocation9 + $0x570] sm:$0xf]
      %v1204 = vld [vmem:[#allocation9 + $0x574] sm:$0xf]
      %v1205 = vld [vmem:[#allocation9 + $0x578] sm:$0xf]
      %v1206 = vld [vmem:[#allocation9 + $0x57c] sm:$0xf]
      %v1207 = vld [vmem:[#allocation9 + $0x580] sm:$0xf]
      %v1208 = vld [vmem:[#allocation9 + $0x584] sm:$0xf]
      %v1209 = vld [vmem:[#allocation9 + $0x588] sm:$0xf]
      %v1210 = vld [vmem:[#allocation9 + $0x58c] sm:$0xf]
      %v1211 = vld [vmem:[#allocation9 + $0x590] sm:$0xf]
      %v1212 = vld [vmem:[#allocation9 + $0x594] sm:$0xf]
      %v1213 = vld [vmem:[#allocation9 + $0x598] sm:$0xf]
      %v1214 = vld [vmem:[#allocation9 + $0x59c] sm:$0xf]
      %v1215 = vld [vmem:[#allocation9 + $0x5a0] sm:$0xf]
      %v1216 = vld [vmem:[#allocation9 + $0x5a4] sm:$0xf]
      %v1217 = vld [vmem:[#allocation9 + $0x5a8] sm:$0xf]
      %v1218 = vld [vmem:[#allocation9 + $0x5ac] sm:$0xf]
      %v1219 = vld [vmem:[#allocation9 + $0x5b0] sm:$0xf]
      %v1220 = vld [vmem:[#allocation9 + $0x5b4] sm:$0xf]
      %v1221 = vld [vmem:[#allocation9 + $0x5b8] sm:$0xf]
      %v1222 = vld [vmem:[#allocation9 + $0x5bc] sm:$0xf]
      %v1223 = vld [vmem:[#allocation9 + $0x5c0] sm:$0xf]
      %v1224 = vld [vmem:[#allocation9 + $0x5c4] sm:$0xf]
      %v1225 = vld [vmem:[#allocation9 + $0x5c8] sm:$0xf]
      %v1226 = vld [vmem:[#allocation9 + $0x5cc] sm:$0xf]
      %v1227 = vld [vmem:[#allocation9 + $0x5d0] sm:$0xf]
      %v1228 = vld [vmem:[#allocation9 + $0x5d4] sm:$0xf]
      %v1229 = vld [vmem:[#allocation9 + $0x5d8] sm:$0xf]
      %v1230 = vld [vmem:[#allocation9 + $0x5dc] sm:$0xf]
      %v1231 = vld [vmem:[#allocation9 + $0x5e0] sm:$0xf]
      %v1232 = vld [vmem:[#allocation9 + $0x5e4] sm:$0xf]
      %v1233 = vld [vmem:[#allocation9 + $0x5e8] sm:$0xf]
      %v1234 = vld [vmem:[#allocation9 + $0x5ec] sm:$0xf]
      %v1235 = vld [vmem:[#allocation9 + $0x5f0] sm:$0xf]
      %v1236 = vld [vmem:[#allocation9 + $0x5f4] sm:$0xf]
      %v1237 = vld [vmem:[#allocation9 + $0x5f8] sm:$0xf]
      %v1238 = vld [vmem:[#allocation9 + $0x5fc] sm:$0xf]
      %v1239 = vld [vmem:[#allocation9 + $0x600] sm:$0xf]
      %v1240 = vld [vmem:[#allocation9 + $0x604] sm:$0xf]
      %v1241 = vld [vmem:[#allocation9 + $0x608] sm:$0xf]
      %v1242 = vld [vmem:[#allocation9 + $0x60c] sm:$0xf]
      %v1243 = vld [vmem:[#allocation9 + $0x610] sm:$0xf]
      %v1244 = vld [vmem:[#allocation9 + $0x614] sm:$0xf]
      %v1245 = vld [vmem:[#allocation9 + $0x618] sm:$0xf]
      %v1246 = vld [vmem:[#allocation9 + $0x61c] sm:$0xf]
      %v1247 = vld [vmem:[#allocation9 + $0x620] sm:$0xf]
      %v1248 = vld [vmem:[#allocation9 + $0x624] sm:$0xf]
      %v1249 = vld [vmem:[#allocation9 + $0x628] sm:$0xf]
      %v1250 = vld [vmem:[#allocation9 + $0x62c] sm:$0xf]
      %v1251 = vld [vmem:[#allocation9 + $0x630] sm:$0xf]
      %v1252 = vld [vmem:[#allocation9 + $0x634] sm:$0xf]
      %v1253 = vld [vmem:[#allocation9 + $0x638] sm:$0xf]
      %v1254 = vld [vmem:[#allocation9 + $0x63c] sm:$0xf]
      %v1255 = vld [vmem:[#allocation9 + $0x640] sm:$0xf]
      %v1256 = vld [vmem:[#allocation9 + $0x644] sm:$0xf]
      %v1257 = vld [vmem:[#allocation9 + $0x648] sm:$0xf]
      %v1258 = vld [vmem:[#allocation9 + $0x64c] sm:$0xf]
      %v1259 = vld [vmem:[#allocation9 + $0x650] sm:$0xf]
      %v1260 = vld [vmem:[#allocation9 + $0x654] sm:$0xf]
      %v1261 = vld [vmem:[#allocation9 + $0x658] sm:$0xf]
      %v1262 = vld [vmem:[#allocation9 + $0x65c] sm:$0xf]
      %v1263 = vld [vmem:[#allocation9 + $0x660] sm:$0xf]
      %v1264 = vld [vmem:[#allocation9 + $0x664] sm:$0xf]
      %v1265 = vld [vmem:[#allocation9 + $0x668] sm:$0xf]
      %v1266 = vld [vmem:[#allocation9 + $0x66c] sm:$0xf]
      %v1267 = vld [vmem:[#allocation9 + $0x670] sm:$0xf]
      %v1268 = vld [vmem:[#allocation9 + $0x674] sm:$0xf]
      %v1269 = vld [vmem:[#allocation9 + $0x678] sm:$0xf]
      %v1270 = vld [vmem:[#allocation9 + $0x67c] sm:$0xf]
      %v1271 = vld [vmem:[#allocation9 + $0x680] sm:$0xf]
      %v1272 = vld [vmem:[#allocation9 + $0x684] sm:$0xf]
      %v1273 = vld [vmem:[#allocation9 + $0x688] sm:$0xf]
      %v1274 = vld [vmem:[#allocation9 + $0x68c] sm:$0xf]
      %v1275 = vld [vmem:[#allocation9 + $0x690] sm:$0xf]
      %v1276 = vld [vmem:[#allocation9 + $0x694] sm:$0xf]
      %v1277 = vld [vmem:[#allocation9 + $0x698] sm:$0xf]
      %v1278 = vld [vmem:[#allocation9 + $0x69c] sm:$0xf]
      %v1279 = vld [vmem:[#allocation9 + $0x6a0] sm:$0xf]
      %v1280 = vld [vmem:[#allocation9 + $0x6a4] sm:$0xf]
      %v1281 = vld [vmem:[#allocation9 + $0x6a8] sm:$0xf]
      %v1282 = vld [vmem:[#allocation9 + $0x6ac] sm:$0xf]
      %v1283 = vld [vmem:[#allocation9 + $0x6b0] sm:$0xf]
      %v1284 = vld [vmem:[#allocation9 + $0x6b4] sm:$0xf]
      %v1285 = vld [vmem:[#allocation9 + $0x6b8] sm:$0xf]
      %v1286 = vld [vmem:[#allocation9 + $0x6bc] sm:$0xf]
      %v1287 = vld [vmem:[#allocation9 + $0x6c0] sm:$0xf]
      %v1288 = vld [vmem:[#allocation9 + $0x6c4] sm:$0xf]
      %v1289 = vld [vmem:[#allocation9 + $0x6c8] sm:$0xf]
      %v1290 = vld [vmem:[#allocation9 + $0x6cc] sm:$0xf]
      %v1291 = vld [vmem:[#allocation9 + $0x6d0] sm:$0xf]
      %v1292 = vld [vmem:[#allocation9 + $0x6d4] sm:$0xf]
      %v1293 = vld [vmem:[#allocation9 + $0x6d8] sm:$0xf]
      %v1294 = vld [vmem:[#allocation9 + $0x6dc] sm:$0xf]
      %v1295 = vld [vmem:[#allocation9 + $0x6e0] sm:$0xf]
      %v1296 = vld [vmem:[#allocation9 + $0x6e4] sm:$0xf]
      %v1297 = vld [vmem:[#allocation9 + $0x6e8] sm:$0xf]
      %v1298 = vld [vmem:[#allocation9 + $0x6ec] sm:$0xf]
      %v1299 = vld [vmem:[#allocation9 + $0x6f0] sm:$0xf]
      %v1300 = vld [vmem:[#allocation9 + $0x6f4] sm:$0xf]
      %v1301 = vld [vmem:[#allocation9 + $0x6f8] sm:$0xf]
      %v1302 = vld [vmem:[#allocation9 + $0x6fc] sm:$0xf]
      %v1303 = vld [vmem:[#allocation9 + $0x700] sm:$0xf]
      %v1304 = vld [vmem:[#allocation9 + $0x704] sm:$0xf]
      %v1305 = vld [vmem:[#allocation9 + $0x708] sm:$0xf]
      %v1306 = vld [vmem:[#allocation9 + $0x70c] sm:$0xf]
      %v1307 = vld [vmem:[#allocation9 + $0x710] sm:$0xf]
      %v1308 = vld [vmem:[#allocation9 + $0x714] sm:$0xf]
      %v1309 = vld [vmem:[#allocation9 + $0x718] sm:$0xf]
      %v1310 = vld [vmem:[#allocation9 + $0x71c] sm:$0xf]
      %v1311 = vld [vmem:[#allocation9 + $0x720] sm:$0xf]
      %v1312 = vld [vmem:[#allocation9 + $0x724] sm:$0xf]
      %v1313 = vld [vmem:[#allocation9 + $0x728] sm:$0xf]
      %v1314 = vld [vmem:[#allocation9 + $0x72c] sm:$0xf]
      %v1315 = vld [vmem:[#allocation9 + $0x730] sm:$0xf]
      %v1316 = vld [vmem:[#allocation9 + $0x734] sm:$0xf]
      %v1317 = vld [vmem:[#allocation9 + $0x738] sm:$0xf]
      %v1318 = vld [vmem:[#allocation9 + $0x73c] sm:$0xf]
      %v1319 = vld [vmem:[#allocation9 + $0x740] sm:$0xf]
      %v1320 = vld [vmem:[#allocation9 + $0x744] sm:$0xf]
      %v1321 = vld [vmem:[#allocation9 + $0x748] sm:$0xf]
      %v1322 = vld [vmem:[#allocation9 + $0x74c] sm:$0xf]
      %v1323 = vld [vmem:[#allocation9 + $0x750] sm:$0xf]
      %v1324 = vld [vmem:[#allocation9 + $0x754] sm:$0xf]
      %v1325 = vld [vmem:[#allocation9 + $0x758] sm:$0xf]
      %v1326 = vld [vmem:[#allocation9 + $0x75c] sm:$0xf]
      %v1327 = vld [vmem:[#allocation9 + $0x760] sm:$0xf]
      %v1328 = vld [vmem:[#allocation9 + $0x764] sm:$0xf]
      %v1329 = vld [vmem:[#allocation9 + $0x768] sm:$0xf]
      %v1330 = vld [vmem:[#allocation9 + $0x76c] sm:$0xf]
      %v1331 = vld [vmem:[#allocation9 + $0x770] sm:$0xf]
      %v1332 = vld [vmem:[#allocation9 + $0x774] sm:$0xf]
      %v1333 = vld [vmem:[#allocation9 + $0x778] sm:$0xf]
      %v1334 = vld [vmem:[#allocation9 + $0x77c] sm:$0xf]
      %v1335 = vld [vmem:[#allocation9 + $0x780] sm:$0xf]
      %v1336 = vld [vmem:[#allocation9 + $0x784] sm:$0xf]
      %v1337 = vld [vmem:[#allocation9 + $0x788] sm:$0xf]
      %v1338 = vld [vmem:[#allocation9 + $0x78c] sm:$0xf]
      %v1339 = vld [vmem:[#allocation9 + $0x790] sm:$0xf]
      %v1340 = vld [vmem:[#allocation9 + $0x794] sm:$0xf]
      %v1341 = vld [vmem:[#allocation9 + $0x798] sm:$0xf]
      %v1342 = vld [vmem:[#allocation9 + $0x79c] sm:$0xf]
      %v1343 = vld [vmem:[#allocation9 + $0x7a0] sm:$0xf]
      %v1344 = vld [vmem:[#allocation9 + $0x7a4] sm:$0xf]
      %v1345 = vld [vmem:[#allocation9 + $0x7a8] sm:$0xf]
      %v1346 = vld [vmem:[#allocation9 + $0x7ac] sm:$0xf]
      %v1347 = vld [vmem:[#allocation9 + $0x7b0] sm:$0xf]
      %v1348 = vld [vmem:[#allocation9 + $0x7b4] sm:$0xf]
      %v1349 = vld [vmem:[#allocation9 + $0x7b8] sm:$0xf]
      %v1350 = vld [vmem:[#allocation9 + $0x7bc] sm:$0xf]
      %v1351 = vld [vmem:[#allocation9 + $0x7c0] sm:$0xf]
      %v1352 = vld [vmem:[#allocation9 + $0x7c4] sm:$0xf]
      %v1353 = vld [vmem:[#allocation9 + $0x7c8] sm:$0xf]
      %v1354 = vld [vmem:[#allocation9 + $0x7cc] sm:$0xf]
      %v1355 = vld [vmem:[#allocation9 + $0x7d0] sm:$0xf]
      %v1356 = vld [vmem:[#allocation9 + $0x7d4] sm:$0xf]
      %v1357 = vld [vmem:[#allocation9 + $0x7d8] sm:$0xf]
      %v1358 = vld [vmem:[#allocation9 + $0x7dc] sm:$0xf]
      %v1359 = vld [vmem:[#allocation9 + $0x7e0] sm:$0xf]
      %v1360 = vld [vmem:[#allocation9 + $0x7e4] sm:$0xf]
      %v1361 = vld [vmem:[#allocation9 + $0x7e8] sm:$0xf]
      %v1362 = vld [vmem:[#allocation9 + $0x7ec] sm:$0xf]
      %v1363 = vld [vmem:[#allocation9 + $0x7f0] sm:$0xf]
      %v1364 = vld [vmem:[#allocation9 + $0x7f4] sm:$0xf]
      %v1365 = vld [vmem:[#allocation9 + $0x7f8] sm:$0xf]
      %v1366 = vld [vmem:[#allocation9 + $0x7fc] sm:$0xf]
      %v1367 = vld [vmem:[%s6] sm:$0x1]
      %v1368 = vunpack.c.l.bf16 %v1367
      %v1369 = vperm.slane %v1368, 0
      %v1882 = vunpack.c.l.b16 %v855
      %v1883 = vunpack.c.l.b16 %v856
      %v1884 = vunpack.c.l.b16 %v857
      %v1885 = vunpack.c.l.b16 %v858
      %v1886 = vunpack.c.l.b16 %v859
      %v1887 = vunpack.c.l.b16 %v860
      %v1888 = vunpack.c.l.b16 %v861
      %v1889 = vunpack.c.l.b16 %v862
      %v1890 = vunpack.c.l.b16 %v863
      %v1891 = vunpack.c.l.b16 %v864
      %v1892 = vunpack.c.l.b16 %v865
      %v1893 = vunpack.c.l.b16 %v866
      %v1894 = vunpack.c.l.b16 %v867
      %v1895 = vunpack.c.l.b16 %v868
      %v1896 = vunpack.c.l.b16 %v869
      %v1897 = vunpack.c.l.b16 %v870
      %v1898 = vunpack.c.l.b16 %v871
      %v1899 = vunpack.c.l.b16 %v872
      %v1900 = vunpack.c.l.b16 %v873
      %v1901 = vunpack.c.l.b16 %v874
      %v1902 = vunpack.c.l.b16 %v875
      %v1903 = vunpack.c.l.b16 %v876
      %v1904 = vunpack.c.l.b16 %v877
      %v1905 = vunpack.c.l.b16 %v878
      %v1906 = vunpack.c.l.b16 %v879
      %v1907 = vunpack.c.l.b16 %v880
      %v1908 = vunpack.c.l.b16 %v881
      %v1909 = vunpack.c.l.b16 %v882
      %v1910 = vunpack.c.l.b16 %v883
      %v1911 = vunpack.c.l.b16 %v884
      %v1912 = vunpack.c.l.b16 %v885
      %v1913 = vunpack.c.l.b16 %v886
      %v1914 = vunpack.c.l.b16 %v887
      %v1915 = vunpack.c.l.b16 %v888
      %v1916 = vunpack.c.l.b16 %v889
      %v1917 = vunpack.c.l.b16 %v890
      %v1918 = vunpack.c.l.b16 %v891
      %v1919 = vunpack.c.l.b16 %v892
      %v1920 = vunpack.c.l.b16 %v893
      %v1921 = vunpack.c.l.b16 %v894
      %v1922 = vunpack.c.l.b16 %v895
      %v1923 = vunpack.c.l.b16 %v896
      %v1924 = vunpack.c.l.b16 %v897
      %v1925 = vunpack.c.l.b16 %v898
      %v1926 = vunpack.c.l.b16 %v899
      %v1927 = vunpack.c.l.b16 %v900
      %v1928 = vunpack.c.l.b16 %v901
      %v1929 = vunpack.c.l.b16 %v902
      %v1930 = vunpack.c.l.b16 %v903
      %v1931 = vunpack.c.l.b16 %v904
      %v1932 = vunpack.c.l.b16 %v905
      %v1933 = vunpack.c.l.b16 %v906
      %v1934 = vunpack.c.l.b16 %v907
      %v1935 = vunpack.c.l.b16 %v908
      %v1936 = vunpack.c.l.b16 %v909
      %v1937 = vunpack.c.l.b16 %v910
      %v1938 = vunpack.c.l.b16 %v911
      %v1939 = vunpack.c.l.b16 %v912
      %v1940 = vunpack.c.l.b16 %v913
      %v1941 = vunpack.c.l.b16 %v914
      %v1942 = vunpack.c.l.b16 %v915
      %v1943 = vunpack.c.l.b16 %v916
      %v1944 = vunpack.c.l.b16 %v917
      %v1945 = vunpack.c.l.b16 %v918
      %v1946 = vunpack.c.l.b16 %v919
      %v1947 = vunpack.c.l.b16 %v920
      %v1948 = vunpack.c.l.b16 %v921
      %v1949 = vunpack.c.l.b16 %v922
      %v1950 = vunpack.c.l.b16 %v923
      %v1951 = vunpack.c.l.b16 %v924
      %v1952 = vunpack.c.l.b16 %v925
      %v1953 = vunpack.c.l.b16 %v926
      %v1954 = vunpack.c.l.b16 %v927
      %v1955 = vunpack.c.l.b16 %v928
      %v1956 = vunpack.c.l.b16 %v929
      %v1957 = vunpack.c.l.b16 %v930
      %v1958 = vunpack.c.l.b16 %v931
      %v1959 = vunpack.c.l.b16 %v932
      %v1960 = vunpack.c.l.b16 %v933
      %v1961 = vunpack.c.l.b16 %v934
      %v1962 = vunpack.c.l.b16 %v935
      %v1963 = vunpack.c.l.b16 %v936
      %v1964 = vunpack.c.l.b16 %v937
      %v1965 = vunpack.c.l.b16 %v938
      %v1966 = vunpack.c.l.b16 %v939
      %v1967 = vunpack.c.l.b16 %v940
      %v1968 = vunpack.c.l.b16 %v941
      %v1969 = vunpack.c.l.b16 %v942
      %v1970 = vunpack.c.l.b16 %v943
      %v1971 = vunpack.c.l.b16 %v944
      %v1972 = vunpack.c.l.b16 %v945
      %v1973 = vunpack.c.l.b16 %v946
      %v1974 = vunpack.c.l.b16 %v947
      %v1975 = vunpack.c.l.b16 %v948
      %v1976 = vunpack.c.l.b16 %v949
      %v1977 = vunpack.c.l.b16 %v950
      %v1978 = vunpack.c.l.b16 %v951
      %v1979 = vunpack.c.l.b16 %v952
      %v1980 = vunpack.c.l.b16 %v953
      %v1981 = vunpack.c.l.b16 %v954
      %v1982 = vunpack.c.l.b16 %v955
      %v1983 = vunpack.c.l.b16 %v956
      %v1984 = vunpack.c.l.b16 %v957
      %v1985 = vunpack.c.l.b16 %v958
      %v1986 = vunpack.c.l.b16 %v959
      %v1987 = vunpack.c.l.b16 %v960
      %v1988 = vunpack.c.l.b16 %v961
      %v1989 = vunpack.c.l.b16 %v962
      %v1990 = vunpack.c.l.b16 %v963
      %v1991 = vunpack.c.l.b16 %v964
      %v1992 = vunpack.c.l.b16 %v965
      %v1993 = vunpack.c.l.b16 %v966
      %v1994 = vunpack.c.l.b16 %v967
      %v1995 = vunpack.c.l.b16 %v968
      %v1996 = vunpack.c.l.b16 %v969
      %v1997 = vunpack.c.l.b16 %v970
      %v1998 = vunpack.c.l.b16 %v971
      %v1999 = vunpack.c.l.b16 %v972
      %v2000 = vunpack.c.l.b16 %v973
      %v2001 = vunpack.c.l.b16 %v974
      %v2002 = vunpack.c.l.b16 %v975
      %v2003 = vunpack.c.l.b16 %v976
      %v2004 = vunpack.c.l.b16 %v977
      %v2005 = vunpack.c.l.b16 %v978
      %v2006 = vunpack.c.l.b16 %v979
      %v2007 = vunpack.c.l.b16 %v980
      %v2008 = vunpack.c.l.b16 %v981
      %v2009 = vunpack.c.l.b16 %v982
      %v2010 = vunpack.c.l.b16 %v983
      %v2011 = vunpack.c.l.b16 %v984
      %v2012 = vunpack.c.l.b16 %v985
      %v2013 = vunpack.c.l.b16 %v986
      %v2014 = vunpack.c.l.b16 %v987
      %v2015 = vunpack.c.l.b16 %v988
      %v2016 = vunpack.c.l.b16 %v989
      %v2017 = vunpack.c.l.b16 %v990
      %v2018 = vunpack.c.l.b16 %v991
      %v2019 = vunpack.c.l.b16 %v992
      %v2020 = vunpack.c.l.b16 %v993
      %v2021 = vunpack.c.l.b16 %v994
      %v2022 = vunpack.c.l.b16 %v995
      %v2023 = vunpack.c.l.b16 %v996
      %v2024 = vunpack.c.l.b16 %v997
      %v2025 = vunpack.c.l.b16 %v998
      %v2026 = vunpack.c.l.b16 %v999
      %v2027 = vunpack.c.l.b16 %v1000
      %v2028 = vunpack.c.l.b16 %v1001
      %v2029 = vunpack.c.l.b16 %v1002
      %v2030 = vunpack.c.l.b16 %v1003
      %v2031 = vunpack.c.l.b16 %v1004
      %v2032 = vunpack.c.l.b16 %v1005
      %v2033 = vunpack.c.l.b16 %v1006
      %v2034 = vunpack.c.l.b16 %v1007
      %v2035 = vunpack.c.l.b16 %v1008
      %v2036 = vunpack.c.l.b16 %v1009
      %v2037 = vunpack.c.l.b16 %v1010
      %v2038 = vunpack.c.l.b16 %v1011
      %v2039 = vunpack.c.l.b16 %v1012
      %v2040 = vunpack.c.l.b16 %v1013
      %v2041 = vunpack.c.l.b16 %v1014
      %v2042 = vunpack.c.l.b16 %v1015
      %v2043 = vunpack.c.l.b16 %v1016
      %v2044 = vunpack.c.l.b16 %v1017
      %v2045 = vunpack.c.l.b16 %v1018
      %v2046 = vunpack.c.l.b16 %v1019
      %v2047 = vunpack.c.l.b16 %v1020
      %v2048 = vunpack.c.l.b16 %v1021
      %v2049 = vunpack.c.l.b16 %v1022
      %v2050 = vunpack.c.l.b16 %v1023
      %v2051 = vunpack.c.l.b16 %v1024
      %v2052 = vunpack.c.l.b16 %v1025
      %v2053 = vunpack.c.l.b16 %v1026
      %v2054 = vunpack.c.l.b16 %v1027
      %v2055 = vunpack.c.l.b16 %v1028
      %v2056 = vunpack.c.l.b16 %v1029
      %v2057 = vunpack.c.l.b16 %v1030
      %v2058 = vunpack.c.l.b16 %v1031
      %v2059 = vunpack.c.l.b16 %v1032
      %v2060 = vunpack.c.l.b16 %v1033
      %v2061 = vunpack.c.l.b16 %v1034
      %v2062 = vunpack.c.l.b16 %v1035
      %v2063 = vunpack.c.l.b16 %v1036
      %v2064 = vunpack.c.l.b16 %v1037
      %v2065 = vunpack.c.l.b16 %v1038
      %v2066 = vunpack.c.l.b16 %v1039
      %v2067 = vunpack.c.l.b16 %v1040
      %v2068 = vunpack.c.l.b16 %v1041
      %v2069 = vunpack.c.l.b16 %v1042
      %v2070 = vunpack.c.l.b16 %v1043
      %v2071 = vunpack.c.l.b16 %v1044
      %v2072 = vunpack.c.l.b16 %v1045
      %v2073 = vunpack.c.l.b16 %v1046
      %v2074 = vunpack.c.l.b16 %v1047
      %v2075 = vunpack.c.l.b16 %v1048
      %v2076 = vunpack.c.l.b16 %v1049
      %v2077 = vunpack.c.l.b16 %v1050
      %v2078 = vunpack.c.l.b16 %v1051
      %v2079 = vunpack.c.l.b16 %v1052
      %v2080 = vunpack.c.l.b16 %v1053
      %v2081 = vunpack.c.l.b16 %v1054
      %v2082 = vunpack.c.l.b16 %v1055
      %v2083 = vunpack.c.l.b16 %v1056
      %v2084 = vunpack.c.l.b16 %v1057
      %v2085 = vunpack.c.l.b16 %v1058
      %v2086 = vunpack.c.l.b16 %v1059
      %v2087 = vunpack.c.l.b16 %v1060
      %v2088 = vunpack.c.l.b16 %v1061
      %v2089 = vunpack.c.l.b16 %v1062
      %v2090 = vunpack.c.l.b16 %v1063
      %v2091 = vunpack.c.l.b16 %v1064
      %v2092 = vunpack.c.l.b16 %v1065
      %v2093 = vunpack.c.l.b16 %v1066
      %v2094 = vunpack.c.l.b16 %v1067
      %v2095 = vunpack.c.l.b16 %v1068
      %v2096 = vunpack.c.l.b16 %v1069
      %v2097 = vunpack.c.l.b16 %v1070
      %v2098 = vunpack.c.l.b16 %v1071
      %v2099 = vunpack.c.l.b16 %v1072
      %v2100 = vunpack.c.l.b16 %v1073
      %v2101 = vunpack.c.l.b16 %v1074
      %v2102 = vunpack.c.l.b16 %v1075
      %v2103 = vunpack.c.l.b16 %v1076
      %v2104 = vunpack.c.l.b16 %v1077
      %v2105 = vunpack.c.l.b16 %v1078
      %v2106 = vunpack.c.l.b16 %v1079
      %v2107 = vunpack.c.l.b16 %v1080
      %v2108 = vunpack.c.l.b16 %v1081
      %v2109 = vunpack.c.l.b16 %v1082
      %v2110 = vunpack.c.l.b16 %v1083
      %v2111 = vunpack.c.l.b16 %v1084
      %v2112 = vunpack.c.l.b16 %v1085
      %v2113 = vunpack.c.l.b16 %v1086
      %v2114 = vunpack.c.l.b16 %v1087
      %v2115 = vunpack.c.l.b16 %v1088
      %v2116 = vunpack.c.l.b16 %v1089
      %v2117 = vunpack.c.l.b16 %v1090
      %v2118 = vunpack.c.l.b16 %v1091
      %v2119 = vunpack.c.l.b16 %v1092
      %v2120 = vunpack.c.l.b16 %v1093
      %v2121 = vunpack.c.l.b16 %v1094
      %v2122 = vunpack.c.l.b16 %v1095
      %v2123 = vunpack.c.l.b16 %v1096
      %v2124 = vunpack.c.l.b16 %v1097
      %v2125 = vunpack.c.l.b16 %v1098
      %v2126 = vunpack.c.l.b16 %v1099
      %v2127 = vunpack.c.l.b16 %v1100
      %v2128 = vunpack.c.l.b16 %v1101
      %v2129 = vunpack.c.l.b16 %v1102
      %v2130 = vunpack.c.l.b16 %v1103
      %v2131 = vunpack.c.l.b16 %v1104
      %v2132 = vunpack.c.l.b16 %v1105
      %v2133 = vunpack.c.l.b16 %v1106
      %v2134 = vunpack.c.l.b16 %v1107
      %v2135 = vunpack.c.l.b16 %v1108
      %v2136 = vunpack.c.l.b16 %v1109
      %v2137 = vunpack.c.l.b16 %v1110
      %v2138 = vunpack.c.l.b16 %v1111
      %v2139 = vunpack.c.l.b16 %v1112
      %v2140 = vunpack.c.l.b16 %v1113
      %v2141 = vunpack.c.l.b16 %v1114
      %v2142 = vunpack.c.l.b16 %v1115
      %v2143 = vunpack.c.l.b16 %v1116
      %v2144 = vunpack.c.l.b16 %v1117
      %v2145 = vunpack.c.l.b16 %v1118
      %v2146 = vunpack.c.l.b16 %v1119
      %v2147 = vunpack.c.l.b16 %v1120
      %v2148 = vunpack.c.l.b16 %v1121
      %v2149 = vunpack.c.l.b16 %v1122
      %v2150 = vunpack.c.l.b16 %v1123
      %v2151 = vunpack.c.l.b16 %v1124
      %v2152 = vunpack.c.l.b16 %v1125
      %v2153 = vunpack.c.l.b16 %v1126
      %v2154 = vunpack.c.l.b16 %v1127
      %v2155 = vunpack.c.l.b16 %v1128
      %v2156 = vunpack.c.l.b16 %v1129
      %v2157 = vunpack.c.l.b16 %v1130
      %v2158 = vunpack.c.l.b16 %v1131
      %v2159 = vunpack.c.l.b16 %v1132
      %v2160 = vunpack.c.l.b16 %v1133
      %v2161 = vunpack.c.l.b16 %v1134
      %v2162 = vunpack.c.l.b16 %v1135
      %v2163 = vunpack.c.l.b16 %v1136
      %v2164 = vunpack.c.l.b16 %v1137
      %v2165 = vunpack.c.l.b16 %v1138
      %v2166 = vunpack.c.l.b16 %v1139
      %v2167 = vunpack.c.l.b16 %v1140
      %v2168 = vunpack.c.l.b16 %v1141
      %v2169 = vunpack.c.l.b16 %v1142
      %v2170 = vunpack.c.l.b16 %v1143
      %v2171 = vunpack.c.l.b16 %v1144
      %v2172 = vunpack.c.l.b16 %v1145
      %v2173 = vunpack.c.l.b16 %v1146
      %v2174 = vunpack.c.l.b16 %v1147
      %v2175 = vunpack.c.l.b16 %v1148
      %v2176 = vunpack.c.l.b16 %v1149
      %v2177 = vunpack.c.l.b16 %v1150
      %v2178 = vunpack.c.l.b16 %v1151
      %v2179 = vunpack.c.l.b16 %v1152
      %v2180 = vunpack.c.l.b16 %v1153
      %v2181 = vunpack.c.l.b16 %v1154
      %v2182 = vunpack.c.l.b16 %v1155
      %v2183 = vunpack.c.l.b16 %v1156
      %v2184 = vunpack.c.l.b16 %v1157
      %v2185 = vunpack.c.l.b16 %v1158
      %v2186 = vunpack.c.l.b16 %v1159
      %v2187 = vunpack.c.l.b16 %v1160
      %v2188 = vunpack.c.l.b16 %v1161
      %v2189 = vunpack.c.l.b16 %v1162
      %v2190 = vunpack.c.l.b16 %v1163
      %v2191 = vunpack.c.l.b16 %v1164
      %v2192 = vunpack.c.l.b16 %v1165
      %v2193 = vunpack.c.l.b16 %v1166
      %v2194 = vunpack.c.l.b16 %v1167
      %v2195 = vunpack.c.l.b16 %v1168
      %v2196 = vunpack.c.l.b16 %v1169
      %v2197 = vunpack.c.l.b16 %v1170
      %v2198 = vunpack.c.l.b16 %v1171
      %v2199 = vunpack.c.l.b16 %v1172
      %v2200 = vunpack.c.l.b16 %v1173
      %v2201 = vunpack.c.l.b16 %v1174
      %v2202 = vunpack.c.l.b16 %v1175
      %v2203 = vunpack.c.l.b16 %v1176
      %v2204 = vunpack.c.l.b16 %v1177
      %v2205 = vunpack.c.l.b16 %v1178
      %v2206 = vunpack.c.l.b16 %v1179
      %v2207 = vunpack.c.l.b16 %v1180
      %v2208 = vunpack.c.l.b16 %v1181
      %v2209 = vunpack.c.l.b16 %v1182
      %v2210 = vunpack.c.l.b16 %v1183
      %v2211 = vunpack.c.l.b16 %v1184
      %v2212 = vunpack.c.l.b16 %v1185
      %v2213 = vunpack.c.l.b16 %v1186
      %v2214 = vunpack.c.l.b16 %v1187
      %v2215 = vunpack.c.l.b16 %v1188
      %v2216 = vunpack.c.l.b16 %v1189
      %v2217 = vunpack.c.l.b16 %v1190
      %v2218 = vunpack.c.l.b16 %v1191
      %v2219 = vunpack.c.l.b16 %v1192
      %v2220 = vunpack.c.l.b16 %v1193
      %v2221 = vunpack.c.l.b16 %v1194
      %v2222 = vunpack.c.l.b16 %v1195
      %v2223 = vunpack.c.l.b16 %v1196
      %v2224 = vunpack.c.l.b16 %v1197
      %v2225 = vunpack.c.l.b16 %v1198
      %v2226 = vunpack.c.l.b16 %v1199
      %v2227 = vunpack.c.l.b16 %v1200
      %v2228 = vunpack.c.l.b16 %v1201
      %v2229 = vunpack.c.l.b16 %v1202
      %v2230 = vunpack.c.l.b16 %v1203
      %v2231 = vunpack.c.l.b16 %v1204
      %v2232 = vunpack.c.l.b16 %v1205
      %v2233 = vunpack.c.l.b16 %v1206
      %v2234 = vunpack.c.l.b16 %v1207
      %v2235 = vunpack.c.l.b16 %v1208
      %v2236 = vunpack.c.l.b16 %v1209
      %v2237 = vunpack.c.l.b16 %v1210
      %v2238 = vunpack.c.l.b16 %v1211
      %v2239 = vunpack.c.l.b16 %v1212
      %v2240 = vunpack.c.l.b16 %v1213
      %v2241 = vunpack.c.l.b16 %v1214
      %v2242 = vunpack.c.l.b16 %v1215
      %v2243 = vunpack.c.l.b16 %v1216
      %v2244 = vunpack.c.l.b16 %v1217
      %v2245 = vunpack.c.l.b16 %v1218
      %v2246 = vunpack.c.l.b16 %v1219
      %v2247 = vunpack.c.l.b16 %v1220
      %v2248 = vunpack.c.l.b16 %v1221
      %v2249 = vunpack.c.l.b16 %v1222
      %v2250 = vunpack.c.l.b16 %v1223
      %v2251 = vunpack.c.l.b16 %v1224
      %v2252 = vunpack.c.l.b16 %v1225
      %v2253 = vunpack.c.l.b16 %v1226
      %v2254 = vunpack.c.l.b16 %v1227
      %v2255 = vunpack.c.l.b16 %v1228
      %v2256 = vunpack.c.l.b16 %v1229
      %v2257 = vunpack.c.l.b16 %v1230
      %v2258 = vunpack.c.l.b16 %v1231
      %v2259 = vunpack.c.l.b16 %v1232
      %v2260 = vunpack.c.l.b16 %v1233
      %v2261 = vunpack.c.l.b16 %v1234
      %v2262 = vunpack.c.l.b16 %v1235
      %v2263 = vunpack.c.l.b16 %v1236
      %v2264 = vunpack.c.l.b16 %v1237
      %v2265 = vunpack.c.l.b16 %v1238
      %v2266 = vunpack.c.l.b16 %v1239
      %v2267 = vunpack.c.l.b16 %v1240
      %v2268 = vunpack.c.l.b16 %v1241
      %v2269 = vunpack.c.l.b16 %v1242
      %v2270 = vunpack.c.l.b16 %v1243
      %v2271 = vunpack.c.l.b16 %v1244
      %v2272 = vunpack.c.l.b16 %v1245
      %v2273 = vunpack.c.l.b16 %v1246
      %v2274 = vunpack.c.l.b16 %v1247
      %v2275 = vunpack.c.l.b16 %v1248
      %v2276 = vunpack.c.l.b16 %v1249
      %v2277 = vunpack.c.l.b16 %v1250
      %v2278 = vunpack.c.l.b16 %v1251
      %v2279 = vunpack.c.l.b16 %v1252
      %v2280 = vunpack.c.l.b16 %v1253
      %v2281 = vunpack.c.l.b16 %v1254
      %v2282 = vunpack.c.l.b16 %v1255
      %v2283 = vunpack.c.l.b16 %v1256
      %v2284 = vunpack.c.l.b16 %v1257
      %v2285 = vunpack.c.l.b16 %v1258
      %v2286 = vunpack.c.l.b16 %v1259
      %v2287 = vunpack.c.l.b16 %v1260
      %v2288 = vunpack.c.l.b16 %v1261
      %v2289 = vunpack.c.l.b16 %v1262
      %v2290 = vunpack.c.l.b16 %v1263
      %v2291 = vunpack.c.l.b16 %v1264
      %v2292 = vunpack.c.l.b16 %v1265
      %v2293 = vunpack.c.l.b16 %v1266
      %v2294 = vunpack.c.l.b16 %v1267
      %v2295 = vunpack.c.l.b16 %v1268
      %v2296 = vunpack.c.l.b16 %v1269
      %v2297 = vunpack.c.l.b16 %v1270
      %v2298 = vunpack.c.l.b16 %v1271
      %v2299 = vunpack.c.l.b16 %v1272
      %v2300 = vunpack.c.l.b16 %v1273
      %v2301 = vunpack.c.l.b16 %v1274
      %v2302 = vunpack.c.l.b16 %v1275
      %v2303 = vunpack.c.l.b16 %v1276
      %v2304 = vunpack.c.l.b16 %v1277
      %v2305 = vunpack.c.l.b16 %v1278
      %v2306 = vunpack.c.l.b16 %v1279
      %v2307 = vunpack.c.l.b16 %v1280
      %v2308 = vunpack.c.l.b16 %v1281
      %v2309 = vunpack.c.l.b16 %v1282
      %v2310 = vunpack.c.l.b16 %v1283
      %v2311 = vunpack.c.l.b16 %v1284
      %v2312 = vunpack.c.l.b16 %v1285
      %v2313 = vunpack.c.l.b16 %v1286
      %v2314 = vunpack.c.l.b16 %v1287
      %v2315 = vunpack.c.l.b16 %v1288
      %v2316 = vunpack.c.l.b16 %v1289
      %v2317 = vunpack.c.l.b16 %v1290
      %v2318 = vunpack.c.l.b16 %v1291
      %v2319 = vunpack.c.l.b16 %v1292
      %v2320 = vunpack.c.l.b16 %v1293
      %v2321 = vunpack.c.l.b16 %v1294
      %v2322 = vunpack.c.l.b16 %v1295
      %v2323 = vunpack.c.l.b16 %v1296
      %v2324 = vunpack.c.l.b16 %v1297
      %v2325 = vunpack.c.l.b16 %v1298
      %v2326 = vunpack.c.l.b16 %v1299
      %v2327 = vunpack.c.l.b16 %v1300
      %v2328 = vunpack.c.l.b16 %v1301
      %v2329 = vunpack.c.l.b16 %v1302
      %v2330 = vunpack.c.l.b16 %v1303
      %v2331 = vunpack.c.l.b16 %v1304
      %v2332 = vunpack.c.l.b16 %v1305
      %v2333 = vunpack.c.l.b16 %v1306
      %v2334 = vunpack.c.l.b16 %v1307
      %v2335 = vunpack.c.l.b16 %v1308
      %v2336 = vunpack.c.l.b16 %v1309
      %v2337 = vunpack.c.l.b16 %v1310
      %v2338 = vunpack.c.l.b16 %v1311
      %v2339 = vunpack.c.l.b16 %v1312
      %v2340 = vunpack.c.l.b16 %v1313
      %v2341 = vunpack.c.l.b16 %v1314
      %v2342 = vunpack.c.l.b16 %v1315
      %v2343 = vunpack.c.l.b16 %v1316
      %v2344 = vunpack.c.l.b16 %v1317
      %v2345 = vunpack.c.l.b16 %v1318
      %v2346 = vunpack.c.l.b16 %v1319
      %v2347 = vunpack.c.l.b16 %v1320
      %v2348 = vunpack.c.l.b16 %v1321
      %v2349 = vunpack.c.l.b16 %v1322
      %v2350 = vunpack.c.l.b16 %v1323
      %v2351 = vunpack.c.l.b16 %v1324
      %v2352 = vunpack.c.l.b16 %v1325
      %v2353 = vunpack.c.l.b16 %v1326
      %v2354 = vunpack.c.l.b16 %v1327
      %v2355 = vunpack.c.l.b16 %v1328
      %v2356 = vunpack.c.l.b16 %v1329
      %v2357 = vunpack.c.l.b16 %v1330
      %v2358 = vunpack.c.l.b16 %v1331
      %v2359 = vunpack.c.l.b16 %v1332
      %v2360 = vunpack.c.l.b16 %v1333
      %v2361 = vunpack.c.l.b16 %v1334
      %v2362 = vunpack.c.l.b16 %v1335
      %v2363 = vunpack.c.l.b16 %v1336
      %v2364 = vunpack.c.l.b16 %v1337
      %v2365 = vunpack.c.l.b16 %v1338
      %v2366 = vunpack.c.l.b16 %v1339
      %v2367 = vunpack.c.l.b16 %v1340
      %v2368 = vunpack.c.l.b16 %v1341
      %v2369 = vunpack.c.l.b16 %v1342
      %v2370 = vunpack.c.l.b16 %v1343
      %v2371 = vunpack.c.l.b16 %v1344
      %v2372 = vunpack.c.l.b16 %v1345
      %v2373 = vunpack.c.l.b16 %v1346
      %v2374 = vunpack.c.l.b16 %v1347
      %v2375 = vunpack.c.l.b16 %v1348
      %v2376 = vunpack.c.l.b16 %v1349
      %v2377 = vunpack.c.l.b16 %v1350
      %v2378 = vunpack.c.l.b16 %v1351
      %v2379 = vunpack.c.l.b16 %v1352
      %v2380 = vunpack.c.l.b16 %v1353
      %v2381 = vunpack.c.l.b16 %v1354
      %v2382 = vunpack.c.l.b16 %v1355
      %v2383 = vunpack.c.l.b16 %v1356
      %v2384 = vunpack.c.l.b16 %v1357
      %v2385 = vunpack.c.l.b16 %v1358
      %v2386 = vunpack.c.l.b16 %v1359
      %v2387 = vunpack.c.l.b16 %v1360
      %v2388 = vunpack.c.l.b16 %v1361
      %v2389 = vunpack.c.l.b16 %v1362
      %v2390 = vunpack.c.l.b16 %v1363
      %v2391 = vunpack.c.l.b16 %v1364
      %v2392 = vunpack.c.l.b16 %v1365
      %v2393 = vunpack.c.l.b16 %v1366
      %v2394 = vpack.c.b16 %v1883, %v1882
      %v2395 = vpack.c.b16 %v1885, %v1884
      %v2396 = vpack.c.b16 %v1887, %v1886
      %v2397 = vpack.c.b16 %v1889, %v1888
      %v2398 = vpack.c.b16 %v1891, %v1890
      %v2399 = vpack.c.b16 %v1893, %v1892
      %v2400 = vpack.c.b16 %v1895, %v1894
      %v2401 = vpack.c.b16 %v1897, %v1896
      %v2402 = vpack.c.b16 %v1899, %v1898
      %v2403 = vpack.c.b16 %v1901, %v1900
      %v2404 = vpack.c.b16 %v1903, %v1902
      %v2405 = vpack.c.b16 %v1905, %v1904
      %v2406 = vpack.c.b16 %v1907, %v1906
      %v2407 = vpack.c.b16 %v1909, %v1908
      %v2408 = vpack.c.b16 %v1911, %v1910
      %v2409 = vpack.c.b16 %v1913, %v1912
      %v2410 = vpack.c.b16 %v1915, %v1914
      %v2411 = vpack.c.b16 %v1917, %v1916
      %v2412 = vpack.c.b16 %v1919, %v1918
      %v2413 = vpack.c.b16 %v1921, %v1920
      %v2414 = vpack.c.b16 %v1923, %v1922
      %v2415 = vpack.c.b16 %v1925, %v1924
      %v2416 = vpack.c.b16 %v1927, %v1926
      %v2417 = vpack.c.b16 %v1929, %v1928
      %v2418 = vpack.c.b16 %v1931, %v1930
      %v2419 = vpack.c.b16 %v1933, %v1932
      %v2420 = vpack.c.b16 %v1935, %v1934
      %v2421 = vpack.c.b16 %v1937, %v1936
      %v2422 = vpack.c.b16 %v1939, %v1938
      %v2423 = vpack.c.b16 %v1941, %v1940
      %v2424 = vpack.c.b16 %v1943, %v1942
      %v2425 = vpack.c.b16 %v1945, %v1944
      %v2426 = vpack.c.b16 %v1947, %v1946
      %v2427 = vpack.c.b16 %v1949, %v1948
      %v2428 = vpack.c.b16 %v1951, %v1950
      %v2429 = vpack.c.b16 %v1953, %v1952
      %v2430 = vpack.c.b16 %v1955, %v1954
      %v2431 = vpack.c.b16 %v1957, %v1956
      %v2432 = vpack.c.b16 %v1959, %v1958
      %v2433 = vpack.c.b16 %v1961, %v1960
      %v2434 = vpack.c.b16 %v1963, %v1962
      %v2435 = vpack.c.b16 %v1965, %v1964
      %v2436 = vpack.c.b16 %v1967, %v1966
      %v2437 = vpack.c.b16 %v1969, %v1968
      %v2438 = vpack.c.b16 %v1971, %v1970
      %v2439 = vpack.c.b16 %v1973, %v1972
      %v2440 = vpack.c.b16 %v1975, %v1974
      %v2441 = vpack.c.b16 %v1977, %v1976
      %v2442 = vpack.c.b16 %v1979, %v1978
      %v2443 = vpack.c.b16 %v1981, %v1980
      %v2444 = vpack.c.b16 %v1983, %v1982
      %v2445 = vpack.c.b16 %v1985, %v1984
      %v2446 = vpack.c.b16 %v1987, %v1986
      %v2447 = vpack.c.b16 %v1989, %v1988
      %v2448 = vpack.c.b16 %v1991, %v1990
      %v2449 = vpack.c.b16 %v1993, %v1992
      %v2450 = vpack.c.b16 %v1995, %v1994
      %v2451 = vpack.c.b16 %v1997, %v1996
      %v2452 = vpack.c.b16 %v1999, %v1998
      %v2453 = vpack.c.b16 %v2001, %v2000
      %v2454 = vpack.c.b16 %v2003, %v2002
      %v2455 = vpack.c.b16 %v2005, %v2004
      %v2456 = vpack.c.b16 %v2007, %v2006
      %v2457 = vpack.c.b16 %v2009, %v2008
      %v2458 = vpack.c.b16 %v2011, %v2010
      %v2459 = vpack.c.b16 %v2013, %v2012
      %v2460 = vpack.c.b16 %v2015, %v2014
      %v2461 = vpack.c.b16 %v2017, %v2016
      %v2462 = vpack.c.b16 %v2019, %v2018
      %v2463 = vpack.c.b16 %v2021, %v2020
      %v2464 = vpack.c.b16 %v2023, %v2022
      %v2465 = vpack.c.b16 %v2025, %v2024
      %v2466 = vpack.c.b16 %v2027, %v2026
      %v2467 = vpack.c.b16 %v2029, %v2028
      %v2468 = vpack.c.b16 %v2031, %v2030
      %v2469 = vpack.c.b16 %v2033, %v2032
      %v2470 = vpack.c.b16 %v2035, %v2034
      %v2471 = vpack.c.b16 %v2037, %v2036
      %v2472 = vpack.c.b16 %v2039, %v2038
      %v2473 = vpack.c.b16 %v2041, %v2040
      %v2474 = vpack.c.b16 %v2043, %v2042
      %v2475 = vpack.c.b16 %v2045, %v2044
      %v2476 = vpack.c.b16 %v2047, %v2046
      %v2477 = vpack.c.b16 %v2049, %v2048
      %v2478 = vpack.c.b16 %v2051, %v2050
      %v2479 = vpack.c.b16 %v2053, %v2052
      %v2480 = vpack.c.b16 %v2055, %v2054
      %v2481 = vpack.c.b16 %v2057, %v2056
      %v2482 = vpack.c.b16 %v2059, %v2058
      %v2483 = vpack.c.b16 %v2061, %v2060
      %v2484 = vpack.c.b16 %v2063, %v2062
      %v2485 = vpack.c.b16 %v2065, %v2064
      %v2486 = vpack.c.b16 %v2067, %v2066
      %v2487 = vpack.c.b16 %v2069, %v2068
      %v2488 = vpack.c.b16 %v2071, %v2070
      %v2489 = vpack.c.b16 %v2073, %v2072
      %v2490 = vpack.c.b16 %v2075, %v2074
      %v2491 = vpack.c.b16 %v2077, %v2076
      %v2492 = vpack.c.b16 %v2079, %v2078
      %v2493 = vpack.c.b16 %v2081, %v2080
      %v2494 = vpack.c.b16 %v2083, %v2082
      %v2495 = vpack.c.b16 %v2085, %v2084
      %v2496 = vpack.c.b16 %v2087, %v2086
      %v2497 = vpack.c.b16 %v2089, %v2088
      %v2498 = vpack.c.b16 %v2091, %v2090
      %v2499 = vpack.c.b16 %v2093, %v2092
      %v2500 = vpack.c.b16 %v2095, %v2094
      %v2501 = vpack.c.b16 %v2097, %v2096
      %v2502 = vpack.c.b16 %v2099, %v2098
      %v2503 = vpack.c.b16 %v2101, %v2100
      %v2504 = vpack.c.b16 %v2103, %v2102
      %v2505 = vpack.c.b16 %v2105, %v2104
      %v2506 = vpack.c.b16 %v2107, %v2106
      %v2507 = vpack.c.b16 %v2109, %v2108
      %v2508 = vpack.c.b16 %v2111, %v2110
      %v2509 = vpack.c.b16 %v2113, %v2112
      %v2510 = vpack.c.b16 %v2115, %v2114
      %v2511 = vpack.c.b16 %v2117, %v2116
      %v2512 = vpack.c.b16 %v2119, %v2118
      %v2513 = vpack.c.b16 %v2121, %v2120
      %v2514 = vpack.c.b16 %v2123, %v2122
      %v2515 = vpack.c.b16 %v2125, %v2124
      %v2516 = vpack.c.b16 %v2127, %v2126
      %v2517 = vpack.c.b16 %v2129, %v2128
      %v2518 = vpack.c.b16 %v2131, %v2130
      %v2519 = vpack.c.b16 %v2133, %v2132
      %v2520 = vpack.c.b16 %v2135, %v2134
      %v2521 = vpack.c.b16 %v2137, %v2136
      %v2522 = vpack.c.b16 %v2139, %v2138
      %v2523 = vpack.c.b16 %v2141, %v2140
      %v2524 = vpack.c.b16 %v2143, %v2142
      %v2525 = vpack.c.b16 %v2145, %v2144
      %v2526 = vpack.c.b16 %v2147, %v2146
      %v2527 = vpack.c.b16 %v2149, %v2148
      %v2528 = vpack.c.b16 %v2151, %v2150
      %v2529 = vpack.c.b16 %v2153, %v2152
      %v2530 = vpack.c.b16 %v2155, %v2154
      %v2531 = vpack.c.b16 %v2157, %v2156
      %v2532 = vpack.c.b16 %v2159, %v2158
      %v2533 = vpack.c.b16 %v2161, %v2160
      %v2534 = vpack.c.b16 %v2163, %v2162
      %v2535 = vpack.c.b16 %v2165, %v2164
      %v2536 = vpack.c.b16 %v2167, %v2166
      %v2537 = vpack.c.b16 %v2169, %v2168
      %v2538 = vpack.c.b16 %v2171, %v2170
      %v2539 = vpack.c.b16 %v2173, %v2172
      %v2540 = vpack.c.b16 %v2175, %v2174
      %v2541 = vpack.c.b16 %v2177, %v2176
      %v2542 = vpack.c.b16 %v2179, %v2178
      %v2543 = vpack.c.b16 %v2181, %v2180
      %v2544 = vpack.c.b16 %v2183, %v2182
      %v2545 = vpack.c.b16 %v2185, %v2184
      %v2546 = vpack.c.b16 %v2187, %v2186
      %v2547 = vpack.c.b16 %v2189, %v2188
      %v2548 = vpack.c.b16 %v2191, %v2190
      %v2549 = vpack.c.b16 %v2193, %v2192
      %v2550 = vpack.c.b16 %v2195, %v2194
      %v2551 = vpack.c.b16 %v2197, %v2196
      %v2552 = vpack.c.b16 %v2199, %v2198
      %v2553 = vpack.c.b16 %v2201, %v2200
      %v2554 = vpack.c.b16 %v2203, %v2202
      %v2555 = vpack.c.b16 %v2205, %v2204
      %v2556 = vpack.c.b16 %v2207, %v2206
      %v2557 = vpack.c.b16 %v2209, %v2208
      %v2558 = vpack.c.b16 %v2211, %v2210
      %v2559 = vpack.c.b16 %v2213, %v2212
      %v2560 = vpack.c.b16 %v2215, %v2214
      %v2561 = vpack.c.b16 %v2217, %v2216
      %v2562 = vpack.c.b16 %v2219, %v2218
      %v2563 = vpack.c.b16 %v2221, %v2220
      %v2564 = vpack.c.b16 %v2223, %v2222
      %v2565 = vpack.c.b16 %v2225, %v2224
      %v2566 = vpack.c.b16 %v2227, %v2226
      %v2567 = vpack.c.b16 %v2229, %v2228
      %v2568 = vpack.c.b16 %v2231, %v2230
      %v2569 = vpack.c.b16 %v2233, %v2232
      %v2570 = vpack.c.b16 %v2235, %v2234
      %v2571 = vpack.c.b16 %v2237, %v2236
      %v2572 = vpack.c.b16 %v2239, %v2238
      %v2573 = vpack.c.b16 %v2241, %v2240
      %v2574 = vpack.c.b16 %v2243, %v2242
      %v2575 = vpack.c.b16 %v2245, %v2244
      %v2576 = vpack.c.b16 %v2247, %v2246
      %v2577 = vpack.c.b16 %v2249, %v2248
      %v2578 = vpack.c.b16 %v2251, %v2250
      %v2579 = vpack.c.b16 %v2253, %v2252
      %v2580 = vpack.c.b16 %v2255, %v2254
      %v2581 = vpack.c.b16 %v2257, %v2256
      %v2582 = vpack.c.b16 %v2259, %v2258
      %v2583 = vpack.c.b16 %v2261, %v2260
      %v2584 = vpack.c.b16 %v2263, %v2262
      %v2585 = vpack.c.b16 %v2265, %v2264
      %v2586 = vpack.c.b16 %v2267, %v2266
      %v2587 = vpack.c.b16 %v2269, %v2268
      %v2588 = vpack.c.b16 %v2271, %v2270
      %v2589 = vpack.c.b16 %v2273, %v2272
      %v2590 = vpack.c.b16 %v2275, %v2274
      %v2591 = vpack.c.b16 %v2277, %v2276
      %v2592 = vpack.c.b16 %v2279, %v2278
      %v2593 = vpack.c.b16 %v2281, %v2280
      %v2594 = vpack.c.b16 %v2283, %v2282
      %v2595 = vpack.c.b16 %v2285, %v2284
      %v2596 = vpack.c.b16 %v2287, %v2286
      %v2597 = vpack.c.b16 %v2289, %v2288
      %v2598 = vpack.c.b16 %v2291, %v2290
      %v2599 = vpack.c.b16 %v2293, %v2292
      %v2600 = vpack.c.b16 %v2295, %v2294
      %v2601 = vpack.c.b16 %v2297, %v2296
      %v2602 = vpack.c.b16 %v2299, %v2298
      %v2603 = vpack.c.b16 %v2301, %v2300
      %v2604 = vpack.c.b16 %v2303, %v2302
      %v2605 = vpack.c.b16 %v2305, %v2304
      %v2606 = vpack.c.b16 %v2307, %v2306
      %v2607 = vpack.c.b16 %v2309, %v2308
      %v2608 = vpack.c.b16 %v2311, %v2310
      %v2609 = vpack.c.b16 %v2313, %v2312
      %v2610 = vpack.c.b16 %v2315, %v2314
      %v2611 = vpack.c.b16 %v2317, %v2316
      %v2612 = vpack.c.b16 %v2319, %v2318
      %v2613 = vpack.c.b16 %v2321, %v2320
      %v2614 = vpack.c.b16 %v2323, %v2322
      %v2615 = vpack.c.b16 %v2325, %v2324
      %v2616 = vpack.c.b16 %v2327, %v2326
      %v2617 = vpack.c.b16 %v2329, %v2328
      %v2618 = vpack.c.b16 %v2331, %v2330
      %v2619 = vpack.c.b16 %v2333, %v2332
      %v2620 = vpack.c.b16 %v2335, %v2334
      %v2621 = vpack.c.b16 %v2337, %v2336
      %v2622 = vpack.c.b16 %v2339, %v2338
      %v2623 = vpack.c.b16 %v2341, %v2340
      %v2624 = vpack.c.b16 %v2343, %v2342
      %v2625 = vpack.c.b16 %v2345, %v2344
      %v2626 = vpack.c.b16 %v2347, %v2346
      %v2627 = vpack.c.b16 %v2349, %v2348
      %v2628 = vpack.c.b16 %v2351, %v2350
      %v2629 = vpack.c.b16 %v2353, %v2352
      %v2630 = vpack.c.b16 %v2355, %v2354
      %v2631 = vpack.c.b16 %v2357, %v2356
      %v2632 = vpack.c.b16 %v2359, %v2358
      %v2633 = vpack.c.b16 %v2361, %v2360
      %v2634 = vpack.c.b16 %v2363, %v2362
      %v2635 = vpack.c.b16 %v2365, %v2364
      %v2636 = vpack.c.b16 %v2367, %v2366
      %v2637 = vpack.c.b16 %v2369, %v2368
      %v2638 = vpack.c.b16 %v2371, %v2370
      %v2639 = vpack.c.b16 %v2373, %v2372
      %v2640 = vpack.c.b16 %v2375, %v2374
      %v2641 = vpack.c.b16 %v2377, %v2376
      %v2642 = vpack.c.b16 %v2379, %v2378
      %v2643 = vpack.c.b16 %v2381, %v2380
      %v2644 = vpack.c.b16 %v2383, %v2382
      %v2645 = vpack.c.b16 %v2385, %v2384
      %v2646 = vpack.c.b16 %v2387, %v2386
      %v2647 = vpack.c.b16 %v2389, %v2388
      %v2648 = vpack.c.b16 %v2391, %v2390
      %v2649 = vpack.c.b16 %v2393, %v2392
      %2906 = vmatpush.bf16.msra.mxu0 %v2401
      %2907 = vmatpush.bf16.msra.mxu0 %v2400
      %2908 = vmatpush.bf16.msra.mxu0 %v2399
      %2909 = vmatpush.bf16.msra.mxu0 %v2398
      %2910 = vmatpush.bf16.msra.mxu0 %v2397
      %2911 = vmatpush.bf16.msra.mxu0 %v2396
      %2912 = vmatpush.bf16.msra.mxu0 %v2395
      %2913 = vmatpush.bf16.msra.mxu0 %v2394
      %2914 = vmatmul.bf16.gmra.mxu0 %v823
      %v2915 = vpop.f32.mrf.mxu0
      %v2916 = vadd.f32 %v1369, %v2915
      %v2917 = vpop.f32.mrf.mxu0
      %2918 = vdwg.mxu0
      %2919 = vmatpush.bf16.msra.mxu0 %v2409
      %2920 = vmatpush.bf16.msra.mxu0 %v2408
      %2921 = vmatpush.bf16.msra.mxu0 %v2407
      %2922 = vmatpush.bf16.msra.mxu0 %v2406
      %2923 = vmatpush.bf16.msra.mxu0 %v2405
      %2924 = vmatpush.bf16.msra.mxu0 %v2404
      %2925 = vmatpush.bf16.msra.mxu0 %v2403
      %2926 = vmatpush.bf16.msra.mxu0 %v2402
      %2927 = vmatmul.bf16.gmra.mxu0 %v824
      %v2928 = vpop.f32.mrf.mxu0
      %v2929 = vadd.f32 %v2916, %v2928
      %v2930 = vpop.f32.mrf.mxu0
      %2931 = vdwg.mxu0
      %2932 = vmatpush.bf16.msra.mxu0 %v2417
      %2933 = vmatpush.bf16.msra.mxu0 %v2416
      %2934 = vmatpush.bf16.msra.mxu0 %v2415
      %2935 = vmatpush.bf16.msra.mxu0 %v2414
      %2936 = vmatpush.bf16.msra.mxu0 %v2413
      %2937 = vmatpush.bf16.msra.mxu0 %v2412
      %2938 = vmatpush.bf16.msra.mxu0 %v2411
      %2939 = vmatpush.bf16.msra.mxu0 %v2410
      %2940 = vmatmul.bf16.gmra.mxu0 %v825
      %v2941 = vpop.f32.mrf.mxu0
      %v2942 = vadd.f32 %v2929, %v2941
      %v2943 = vpop.f32.mrf.mxu0
      %2944 = vdwg.mxu0
      %2945 = vmatpush.bf16.msra.mxu0 %v2425
      %2946 = vmatpush.bf16.msra.mxu0 %v2424
      %2947 = vmatpush.bf16.msra.mxu0 %v2423
      %2948 = vmatpush.bf16.msra.mxu0 %v2422
      %2949 = vmatpush.bf16.msra.mxu0 %v2421
      %2950 = vmatpush.bf16.msra.mxu0 %v2420
      %2951 = vmatpush.bf16.msra.mxu0 %v2419
      %2952 = vmatpush.bf16.msra.mxu0 %v2418
      %2953 = vmatmul.bf16.gmra.mxu0 %v826
      %v2954 = vpop.f32.mrf.mxu0
      %v2955 = vadd.f32 %v2942, %v2954
      %v2956 = vpop.f32.mrf.mxu0
      %2957 = vdwg.mxu0
      %2958 = vmatpush.bf16.msra.mxu0 %v2433
      %2959 = vmatpush.bf16.msra.mxu0 %v2432
      %2960 = vmatpush.bf16.msra.mxu0 %v2431
      %2961 = vmatpush.bf16.msra.mxu0 %v2430
      %2962 = vmatpush.bf16.msra.mxu0 %v2429
      %2963 = vmatpush.bf16.msra.mxu0 %v2428
      %2964 = vmatpush.bf16.msra.mxu0 %v2427
      %2965 = vmatpush.bf16.msra.mxu0 %v2426
      %2966 = vmatmul.bf16.gmra.mxu0 %v827
      %v2967 = vpop.f32.mrf.mxu0
      %v2968 = vadd.f32 %v2955, %v2967
      %v2969 = vpop.f32.mrf.mxu0
      %2970 = vdwg.mxu0
      %2971 = vmatpush.bf16.msra.mxu0 %v2441
      %2972 = vmatpush.bf16.msra.mxu0 %v2440
      %2973 = vmatpush.bf16.msra.mxu0 %v2439
      %2974 = vmatpush.bf16.msra.mxu0 %v2438
      %2975 = vmatpush.bf16.msra.mxu0 %v2437
      %2976 = vmatpush.bf16.msra.mxu0 %v2436
      %2977 = vmatpush.bf16.msra.mxu0 %v2435
      %2978 = vmatpush.bf16.msra.mxu0 %v2434
      %2979 = vmatmul.bf16.gmra.mxu0 %v828
      %v2980 = vpop.f32.mrf.mxu0
      %v2981 = vadd.f32 %v2968, %v2980
      %v2982 = vpop.f32.mrf.mxu0
      %2983 = vdwg.mxu0
      %2984 = vmatpush.bf16.msra.mxu0 %v2449
      %2985 = vmatpush.bf16.msra.mxu0 %v2448
      %2986 = vmatpush.bf16.msra.mxu0 %v2447
      %2987 = vmatpush.bf16.msra.mxu0 %v2446
      %2988 = vmatpush.bf16.msra.mxu0 %v2445
      %2989 = vmatpush.bf16.msra.mxu0 %v2444
      %2990 = vmatpush.bf16.msra.mxu0 %v2443
      %2991 = vmatpush.bf16.msra.mxu0 %v2442
      %2992 = vmatmul.bf16.gmra.mxu0 %v829
      %v2993 = vpop.f32.mrf.mxu0
      %v2994 = vadd.f32 %v2981, %v2993
      %v2995 = vpop.f32.mrf.mxu0
      %2996 = vdwg.mxu0
      %2997 = vmatpush.bf16.msra.mxu0 %v2457
      %2998 = vmatpush.bf16.msra.mxu0 %v2456
      %2999 = vmatpush.bf16.msra.mxu0 %v2455
      %3000 = vmatpush.bf16.msra.mxu0 %v2454
      %3001 = vmatpush.bf16.msra.mxu0 %v2453
      %3002 = vmatpush.bf16.msra.mxu0 %v2452
      %3003 = vmatpush.bf16.msra.mxu0 %v2451
      %3004 = vmatpush.bf16.msra.mxu0 %v2450
      %3005 = vmatmul.bf16.gmra.mxu0 %v830
      %v3006 = vpop.f32.mrf.mxu0
      %v3007 = vadd.f32 %v2994, %v3006
      %v3008 = vpop.f32.mrf.mxu0
      %3009 = vdwg.mxu0
      %3010 = vmatpush.bf16.msra.mxu0 %v2465
      %3011 = vmatpush.bf16.msra.mxu0 %v2464
      %3012 = vmatpush.bf16.msra.mxu0 %v2463
      %3013 = vmatpush.bf16.msra.mxu0 %v2462
      %3014 = vmatpush.bf16.msra.mxu0 %v2461
      %3015 = vmatpush.bf16.msra.mxu0 %v2460
      %3016 = vmatpush.bf16.msra.mxu0 %v2459
      %3017 = vmatpush.bf16.msra.mxu0 %v2458
      %3018 = vmatmul.bf16.gmra.mxu0 %v831
      %v3019 = vpop.f32.mrf.mxu0
      %v3020 = vadd.f32 %v3007, %v3019
      %v3021 = vpop.f32.mrf.mxu0
      %3022 = vdwg.mxu0
      %3023 = vmatpush.bf16.msra.mxu0 %v2473
      %3024 = vmatpush.bf16.msra.mxu0 %v2472
      %3025 = vmatpush.bf16.msra.mxu0 %v2471
      %3026 = vmatpush.bf16.msra.mxu0 %v2470
      %3027 = vmatpush.bf16.msra.mxu0 %v2469
      %3028 = vmatpush.bf16.msra.mxu0 %v2468
      %3029 = vmatpush.bf16.msra.mxu0 %v2467
      %3030 = vmatpush.bf16.msra.mxu0 %v2466
      %3031 = vmatmul.bf16.gmra.mxu0 %v832
      %v3032 = vpop.f32.mrf.mxu0
      %v3033 = vadd.f32 %v3020, %v3032
      %v3034 = vpop.f32.mrf.mxu0
      %3035 = vdwg.mxu0
      %3036 = vmatpush.bf16.msra.mxu0 %v2481
      %3037 = vmatpush.bf16.msra.mxu0 %v2480
      %3038 = vmatpush.bf16.msra.mxu0 %v2479
      %3039 = vmatpush.bf16.msra.mxu0 %v2478
      %3040 = vmatpush.bf16.msra.mxu0 %v2477
      %3041 = vmatpush.bf16.msra.mxu0 %v2476
      %3042 = vmatpush.bf16.msra.mxu0 %v2475
      %3043 = vmatpush.bf16.msra.mxu0 %v2474
      %3044 = vmatmul.bf16.gmra.mxu0 %v833
      %v3045 = vpop.f32.mrf.mxu0
      %v3046 = vadd.f32 %v3033, %v3045
      %v3047 = vpop.f32.mrf.mxu0
      %3048 = vdwg.mxu0
      %3049 = vmatpush.bf16.msra.mxu0 %v2489
      %3050 = vmatpush.bf16.msra.mxu0 %v2488
      %3051 = vmatpush.bf16.msra.mxu0 %v2487
      %3052 = vmatpush.bf16.msra.mxu0 %v2486
      %3053 = vmatpush.bf16.msra.mxu0 %v2485
      %3054 = vmatpush.bf16.msra.mxu0 %v2484
      %3055 = vmatpush.bf16.msra.mxu0 %v2483
      %3056 = vmatpush.bf16.msra.mxu0 %v2482
      %3057 = vmatmul.bf16.gmra.mxu0 %v834
      %v3058 = vpop.f32.mrf.mxu0
      %v3059 = vadd.f32 %v3046, %v3058
      %v3060 = vpop.f32.mrf.mxu0
      %3061 = vdwg.mxu0
      %3062 = vmatpush.bf16.msra.mxu0 %v2497
      %3063 = vmatpush.bf16.msra.mxu0 %v2496
      %3064 = vmatpush.bf16.msra.mxu0 %v2495
      %3065 = vmatpush.bf16.msra.mxu0 %v2494
      %3066 = vmatpush.bf16.msra.mxu0 %v2493
      %3067 = vmatpush.bf16.msra.mxu0 %v2492
      %3068 = vmatpush.bf16.msra.mxu0 %v2491
      %3069 = vmatpush.bf16.msra.mxu0 %v2490
      %3070 = vmatmul.bf16.gmra.mxu0 %v835
      %v3071 = vpop.f32.mrf.mxu0
      %v3072 = vadd.f32 %v3059, %v3071
      %v3073 = vpop.f32.mrf.mxu0
      %3074 = vdwg.mxu0
      %3075 = vmatpush.bf16.msra.mxu0 %v2505
      %3076 = vmatpush.bf16.msra.mxu0 %v2504
      %3077 = vmatpush.bf16.msra.mxu0 %v2503
      %3078 = vmatpush.bf16.msra.mxu0 %v2502
      %3079 = vmatpush.bf16.msra.mxu0 %v2501
      %3080 = vmatpush.bf16.msra.mxu0 %v2500
      %3081 = vmatpush.bf16.msra.mxu0 %v2499
      %3082 = vmatpush.bf16.msra.mxu0 %v2498
      %3083 = vmatmul.bf16.gmra.mxu0 %v836
      %v3084 = vpop.f32.mrf.mxu0
      %v3085 = vadd.f32 %v3072, %v3084
      %v3086 = vpop.f32.mrf.mxu0
      %3087 = vdwg.mxu0
      %3088 = vmatpush.bf16.msra.mxu0 %v2513
      %3089 = vmatpush.bf16.msra.mxu0 %v2512
      %3090 = vmatpush.bf16.msra.mxu0 %v2511
      %3091 = vmatpush.bf16.msra.mxu0 %v2510
      %3092 = vmatpush.bf16.msra.mxu0 %v2509
      %3093 = vmatpush.bf16.msra.mxu0 %v2508
      %3094 = vmatpush.bf16.msra.mxu0 %v2507
      %3095 = vmatpush.bf16.msra.mxu0 %v2506
      %3096 = vmatmul.bf16.gmra.mxu0 %v837
      %v3097 = vpop.f32.mrf.mxu0
      %v3098 = vadd.f32 %v3085, %v3097
      %v3099 = vpop.f32.mrf.mxu0
      %3100 = vdwg.mxu0
      %3101 = vmatpush.bf16.msra.mxu0 %v2521
      %3102 = vmatpush.bf16.msra.mxu0 %v2520
      %3103 = vmatpush.bf16.msra.mxu0 %v2519
      %3104 = vmatpush.bf16.msra.mxu0 %v2518
      %3105 = vmatpush.bf16.msra.mxu0 %v2517
      %3106 = vmatpush.bf16.msra.mxu0 %v2516
      %3107 = vmatpush.bf16.msra.mxu0 %v2515
      %3108 = vmatpush.bf16.msra.mxu0 %v2514
      %3109 = vmatmul.bf16.gmra.mxu0 %v838
      %v3110 = vpop.f32.mrf.mxu0
      %v3111 = vadd.f32 %v3098, %v3110
      %v3112 = vpop.f32.mrf.mxu0
      %3113 = vdwg.mxu0
      %3114 = vmatpush.bf16.msra.mxu0 %v2529
      %3115 = vmatpush.bf16.msra.mxu0 %v2528
      %3116 = vmatpush.bf16.msra.mxu0 %v2527
      %3117 = vmatpush.bf16.msra.mxu0 %v2526
      %3118 = vmatpush.bf16.msra.mxu0 %v2525
      %3119 = vmatpush.bf16.msra.mxu0 %v2524
      %3120 = vmatpush.bf16.msra.mxu0 %v2523
      %3121 = vmatpush.bf16.msra.mxu0 %v2522
      %3122 = vmatmul.bf16.gmra.mxu0 %v839
      %v3123 = vpop.f32.mrf.mxu0
      %v3124 = vadd.f32 %v3111, %v3123
      %v3125 = vpop.f32.mrf.mxu0
      %3126 = vdwg.mxu0
      %3127 = vmatpush.bf16.msra.mxu0 %v2537
      %3128 = vmatpush.bf16.msra.mxu0 %v2536
      %3129 = vmatpush.bf16.msra.mxu0 %v2535
      %3130 = vmatpush.bf16.msra.mxu0 %v2534
      %3131 = vmatpush.bf16.msra.mxu0 %v2533
      %3132 = vmatpush.bf16.msra.mxu0 %v2532
      %3133 = vmatpush.bf16.msra.mxu0 %v2531
      %3134 = vmatpush.bf16.msra.mxu0 %v2530
      %3135 = vmatmul.bf16.gmra.mxu0 %v840
      %v3136 = vpop.f32.mrf.mxu0
      %v3137 = vadd.f32 %v3124, %v3136
      %v3138 = vpop.f32.mrf.mxu0
      %3139 = vdwg.mxu0
      %3140 = vmatpush.bf16.msra.mxu0 %v2545
      %3141 = vmatpush.bf16.msra.mxu0 %v2544
      %3142 = vmatpush.bf16.msra.mxu0 %v2543
      %3143 = vmatpush.bf16.msra.mxu0 %v2542
      %3144 = vmatpush.bf16.msra.mxu0 %v2541
      %3145 = vmatpush.bf16.msra.mxu0 %v2540
      %3146 = vmatpush.bf16.msra.mxu0 %v2539
      %3147 = vmatpush.bf16.msra.mxu0 %v2538
      %3148 = vmatmul.bf16.gmra.mxu0 %v841
      %v3149 = vpop.f32.mrf.mxu0
      %v3150 = vadd.f32 %v3137, %v3149
      %v3151 = vpop.f32.mrf.mxu0
      %3152 = vdwg.mxu0
      %3153 = vmatpush.bf16.msra.mxu0 %v2553
      %3154 = vmatpush.bf16.msra.mxu0 %v2552
      %3155 = vmatpush.bf16.msra.mxu0 %v2551
      %3156 = vmatpush.bf16.msra.mxu0 %v2550
      %3157 = vmatpush.bf16.msra.mxu0 %v2549
      %3158 = vmatpush.bf16.msra.mxu0 %v2548
      %3159 = vmatpush.bf16.msra.mxu0 %v2547
      %3160 = vmatpush.bf16.msra.mxu0 %v2546
      %3161 = vmatmul.bf16.gmra.mxu0 %v842
      %v3162 = vpop.f32.mrf.mxu0
      %v3163 = vadd.f32 %v3150, %v3162
      %v3164 = vpop.f32.mrf.mxu0
      %3165 = vdwg.mxu0
      %3166 = vmatpush.bf16.msra.mxu0 %v2561
      %3167 = vmatpush.bf16.msra.mxu0 %v2560
      %3168 = vmatpush.bf16.msra.mxu0 %v2559
      %3169 = vmatpush.bf16.msra.mxu0 %v2558
      %3170 = vmatpush.bf16.msra.mxu0 %v2557
      %3171 = vmatpush.bf16.msra.mxu0 %v2556
      %3172 = vmatpush.bf16.msra.mxu0 %v2555
      %3173 = vmatpush.bf16.msra.mxu0 %v2554
      %3174 = vmatmul.bf16.gmra.mxu0 %v843
      %v3175 = vpop.f32.mrf.mxu0
      %v3176 = vadd.f32 %v3163, %v3175
      %v3177 = vpop.f32.mrf.mxu0
      %3178 = vdwg.mxu0
      %3179 = vmatpush.bf16.msra.mxu0 %v2569
      %3180 = vmatpush.bf16.msra.mxu0 %v2568
      %3181 = vmatpush.bf16.msra.mxu0 %v2567
      %3182 = vmatpush.bf16.msra.mxu0 %v2566
      %3183 = vmatpush.bf16.msra.mxu0 %v2565
      %3184 = vmatpush.bf16.msra.mxu0 %v2564
      %3185 = vmatpush.bf16.msra.mxu0 %v2563
      %3186 = vmatpush.bf16.msra.mxu0 %v2562
      %3187 = vmatmul.bf16.gmra.mxu0 %v844
      %v3188 = vpop.f32.mrf.mxu0
      %v3189 = vadd.f32 %v3176, %v3188
      %v3190 = vpop.f32.mrf.mxu0
      %3191 = vdwg.mxu0
      %3192 = vmatpush.bf16.msra.mxu0 %v2577
      %3193 = vmatpush.bf16.msra.mxu0 %v2576
      %3194 = vmatpush.bf16.msra.mxu0 %v2575
      %3195 = vmatpush.bf16.msra.mxu0 %v2574
      %3196 = vmatpush.bf16.msra.mxu0 %v2573
      %3197 = vmatpush.bf16.msra.mxu0 %v2572
      %3198 = vmatpush.bf16.msra.mxu0 %v2571
      %3199 = vmatpush.bf16.msra.mxu0 %v2570
      %3200 = vmatmul.bf16.gmra.mxu0 %v845
      %v3201 = vpop.f32.mrf.mxu0
      %v3202 = vadd.f32 %v3189, %v3201
      %v3203 = vpop.f32.mrf.mxu0
      %3204 = vdwg.mxu0
      %3205 = vmatpush.bf16.msra.mxu0 %v2585
      %3206 = vmatpush.bf16.msra.mxu0 %v2584
      %3207 = vmatpush.bf16.msra.mxu0 %v2583
      %3208 = vmatpush.bf16.msra.mxu0 %v2582
      %3209 = vmatpush.bf16.msra.mxu0 %v2581
      %3210 = vmatpush.bf16.msra.mxu0 %v2580
      %3211 = vmatpush.bf16.msra.mxu0 %v2579
      %3212 = vmatpush.bf16.msra.mxu0 %v2578
      %3213 = vmatmul.bf16.gmra.mxu0 %v846
      %v3214 = vpop.f32.mrf.mxu0
      %v3215 = vadd.f32 %v3202, %v3214
      %v3216 = vpop.f32.mrf.mxu0
      %3217 = vdwg.mxu0
      %3218 = vmatpush.bf16.msra.mxu0 %v2593
      %3219 = vmatpush.bf16.msra.mxu0 %v2592
      %3220 = vmatpush.bf16.msra.mxu0 %v2591
      %3221 = vmatpush.bf16.msra.mxu0 %v2590
      %3222 = vmatpush.bf16.msra.mxu0 %v2589
      %3223 = vmatpush.bf16.msra.mxu0 %v2588
      %3224 = vmatpush.bf16.msra.mxu0 %v2587
      %3225 = vmatpush.bf16.msra.mxu0 %v2586
      %3226 = vmatmul.bf16.gmra.mxu0 %v847
      %v3227 = vpop.f32.mrf.mxu0
      %v3228 = vadd.f32 %v3215, %v3227
      %v3229 = vpop.f32.mrf.mxu0
      %3230 = vdwg.mxu0
      %3231 = vmatpush.bf16.msra.mxu0 %v2601
      %3232 = vmatpush.bf16.msra.mxu0 %v2600
      %3233 = vmatpush.bf16.msra.mxu0 %v2599
      %3234 = vmatpush.bf16.msra.mxu0 %v2598
      %3235 = vmatpush.bf16.msra.mxu0 %v2597
      %3236 = vmatpush.bf16.msra.mxu0 %v2596
      %3237 = vmatpush.bf16.msra.mxu0 %v2595
      %3238 = vmatpush.bf16.msra.mxu0 %v2594
      %3239 = vmatmul.bf16.gmra.mxu0 %v848
      %v3240 = vpop.f32.mrf.mxu0
      %v3241 = vadd.f32 %v3228, %v3240
      %v3242 = vpop.f32.mrf.mxu0
      %3243 = vdwg.mxu0
      %3244 = vmatpush.bf16.msra.mxu0 %v2609
      %3245 = vmatpush.bf16.msra.mxu0 %v2608
      %3246 = vmatpush.bf16.msra.mxu0 %v2607
      %3247 = vmatpush.bf16.msra.mxu0 %v2606
      %3248 = vmatpush.bf16.msra.mxu0 %v2605
      %3249 = vmatpush.bf16.msra.mxu0 %v2604
      %3250 = vmatpush.bf16.msra.mxu0 %v2603
      %3251 = vmatpush.bf16.msra.mxu0 %v2602
      %3252 = vmatmul.bf16.gmra.mxu0 %v849
      %v3253 = vpop.f32.mrf.mxu0
      %v3254 = vadd.f32 %v3241, %v3253
      %v3255 = vpop.f32.mrf.mxu0
      %3256 = vdwg.mxu0
      %3257 = vmatpush.bf16.msra.mxu0 %v2617
      %3258 = vmatpush.bf16.msra.mxu0 %v2616
      %3259 = vmatpush.bf16.msra.mxu0 %v2615
      %3260 = vmatpush.bf16.msra.mxu0 %v2614
      %3261 = vmatpush.bf16.msra.mxu0 %v2613
      %3262 = vmatpush.bf16.msra.mxu0 %v2612
      %3263 = vmatpush.bf16.msra.mxu0 %v2611
      %3264 = vmatpush.bf16.msra.mxu0 %v2610
      %3265 = vmatmul.bf16.gmra.mxu0 %v850
      %v3266 = vpop.f32.mrf.mxu0
      %v3267 = vadd.f32 %v3254, %v3266
      %v3268 = vpop.f32.mrf.mxu0
      %3269 = vdwg.mxu0
      %3270 = vmatpush.bf16.msra.mxu0 %v2625
      %3271 = vmatpush.bf16.msra.mxu0 %v2624
      %3272 = vmatpush.bf16.msra.mxu0 %v2623
      %3273 = vmatpush.bf16.msra.mxu0 %v2622
      %3274 = vmatpush.bf16.msra.mxu0 %v2621
      %3275 = vmatpush.bf16.msra.mxu0 %v2620
      %3276 = vmatpush.bf16.msra.mxu0 %v2619
      %3277 = vmatpush.bf16.msra.mxu0 %v2618
      %3278 = vmatmul.bf16.gmra.mxu0 %v851
      %v3279 = vpop.f32.mrf.mxu0
      %v3280 = vadd.f32 %v3267, %v3279
      %v3281 = vpop.f32.mrf.mxu0
      %3282 = vdwg.mxu0
      %3283 = vmatpush.bf16.msra.mxu0 %v2633
      %3284 = vmatpush.bf16.msra.mxu0 %v2632
      %3285 = vmatpush.bf16.msra.mxu0 %v2631
      %3286 = vmatpush.bf16.msra.mxu0 %v2630
      %3287 = vmatpush.bf16.msra.mxu0 %v2629
      %3288 = vmatpush.bf16.msra.mxu0 %v2628
      %3289 = vmatpush.bf16.msra.mxu0 %v2627
      %3290 = vmatpush.bf16.msra.mxu0 %v2626
      %3291 = vmatmul.bf16.gmra.mxu0 %v852
      %v3292 = vpop.f32.mrf.mxu0
      %v3293 = vadd.f32 %v3280, %v3292
      %v3294 = vpop.f32.mrf.mxu0
      %3295 = vdwg.mxu0
      %3296 = vmatpush.bf16.msra.mxu0 %v2641
      %3297 = vmatpush.bf16.msra.mxu0 %v2640
      %3298 = vmatpush.bf16.msra.mxu0 %v2639
      %3299 = vmatpush.bf16.msra.mxu0 %v2638
      %3300 = vmatpush.bf16.msra.mxu0 %v2637
      %3301 = vmatpush.bf16.msra.mxu0 %v2636
      %3302 = vmatpush.bf16.msra.mxu0 %v2635
      %3303 = vmatpush.bf16.msra.mxu0 %v2634
      %3304 = vmatmul.bf16.gmra.mxu0 %v853
      %v3305 = vpop.f32.mrf.mxu0
      %v3306 = vadd.f32 %v3293, %v3305
      %v3307 = vpop.f32.mrf.mxu0
      %3308 = vdwg.mxu0
      %3309 = vmatpush.bf16.msra.mxu0 %v2649
      %3310 = vmatpush.bf16.msra.mxu0 %v2648
      %3311 = vmatpush.bf16.msra.mxu0 %v2647
      %3312 = vmatpush.bf16.msra.mxu0 %v2646
      %3313 = vmatpush.bf16.msra.mxu0 %v2645
      %3314 = vmatpush.bf16.msra.mxu0 %v2644
      %3315 = vmatpush.bf16.msra.mxu0 %v2643
      %3316 = vmatpush.bf16.msra.mxu0 %v2642
      %3317 = vmatmul.bf16.gmra.mxu0 %v854
      %v3318 = vpop.f32.mrf.mxu0
      %v3319 = vadd.f32 %v3306, %v3318
      %v3320 = vpop.f32.mrf.mxu0
      %3321 = vdwg.mxu0
      %3322 = vst [vmem:[#allocation11] sm:$0x3] %v3319
    $region53: #{tpu_custom_call.1} parent=1 // pred_fallthru
      _
    // Predicated region
    $region54: #{tpu_custom_call.1} parent=1 // pred_check
      _
    $region55: #{tpu_custom_call.1} parent=1 // pred_check_branch
      %3324 = sbr.rel (0) target = $region57
    $region56: #{tpu_custom_call.1} parent=1 // pred_region
      %3326 = vsyncadd [#allocation5], 0
      %s3328 = sshll.u32 [#allocation11], 4
      %s3329 = int_to_ptr.vmem [resolvable:$true] %s3328
      %s3330 = sshll.u32 %s7, 4
      %s3331 = int_to_ptr.hbm [resolvable:$true] %s3330
      %3333 = dma.vmem_to_hbm [thread:$0]  %s3329, 32, %s3331, [#allocation5]
    $region57: #{tpu_custom_call.1} parent=1 // pred_fallthru
      _
    // Predicated region
    $region58: #{tpu_custom_call.1} parent=1 // pred_check
      _
    $region59: #{tpu_custom_call.1} parent=1 // pred_check_branch
      %3335 = sbr.rel (0) target = $region61
    $region60: #{tpu_custom_call.1} parent=1 // pred_region
      %3337 = dma.done [#allocation5], 32
    $region61: #{tpu_custom_call.1} parent=1 // pred_fallthru
      _
    %3338 = vsyncpa [#allocation4], 1
    %3339 = vsyncpa [#allocation7], 1
    %3340 = vsyncpa [#allocation10], 1
    %3341 = vsyncpa [#allocation5], 1

</llo_original>
